<compile_context>
chip_gen: v7x
topology: tpu7x:2x2x1
jax: 0.10.0
libtpu: 0.0.40
codegen_flags: <defaults>
</compile_context>

<pallas_src>
import math
import functools

import jax
import jax.numpy as jnp
from jax import lax
from jax.experimental import pallas as pl
from jax.experimental.pallas import tpu as pltpu


def make_lstm_kernel(num_layers, T, B, B_pad, I, H, O):
    """Builds the Pallas kernel body for a `num_layers`-deep LSTM + Linear."""

    def kernel(x_ref, lstm_ref, fc_ref, out_ref, seq_ref, pre_ref):
        # x_ref    : (B, T*I)        f32   raw input, batch-major
        # lstm_ref : (L, 2H+1, 4H)   f32   [w_ih_pad ; w_hh ; bias] per layer,
        #                                  gate column order (i, f, o, g)
        # fc_ref   : (H+1, O)        f32   [fc_w ; fc_b]
        # out_ref  : (B, O)          f32
        # seq_ref  : (T*B_pad, H)    f32   VMEM scratch: layer input sequence
        # pre_ref  : (T*B_pad, 4H)   f32   VMEM scratch: hoisted input proj.
        f32 = jnp.float32
        bf16 = jnp.bfloat16

        # ---- one-time staging of x: time-major, batch- and column-padded ----
        # (zero the scratch so padded batch rows and columns I..H-1 are 0,
        #  which makes layer 0 identical in structure to the deeper layers)
        seq_ref[...] = jnp.zeros_like(seq_ref)
        xv = x_ref[...]                                       # (B, T*I)
        for t in range(T):
            seq_ref[t * B_pad: t * B_pad + B, 0:I] = xv[:, t * I:(t + 1) * I]

        h_last = None
        for l in range(num_layers):
            wslab = lstm_ref[l]                               # (2H+1, 4H) f32
            w_ih = wslab[0:H, :].astype(bf16)                 # (H, 4H)
            w_hh = wslab[H:2 * H, :].astype(bf16)             # (H, 4H)
            bias = wslab[2 * H:2 * H + 1, :]                  # (1, 4H) f32

            # Hoisted input projection + bias: ONE batched MXU matmul over all
            # T timesteps (outside the serial recurrence), result parked in
            # VMEM scratch and re-read as aligned (B_pad, 4H) tiles per step.
            in_seq = seq_ref[...].astype(bf16)                # (T*B_pad, H)
            pre_ref[...] = (jnp.dot(in_seq, w_ih,
                                    preferred_element_type=f32) + bias)

            h = jnp.zeros((B_pad, H), f32)
            c = jnp.zeros((B_pad, H), f32)
            store_seq = l < num_layers - 1
            # T is static & tiny -> full unroll with static, tile-aligned
            # indices everywhere; only h @ w_hh sits on the serial chain.
            for t in range(T):
                gates = pre_ref[t * B_pad:(t + 1) * B_pad, :] + jnp.dot(
                    h.astype(bf16), w_hh, preferred_element_type=f32)
                # gate order (i, f, o, g): one sigmoid over 3H, one tanh over H
                sig = jax.nn.sigmoid(gates[:, 0:3 * H])
                g_g = jnp.tanh(gates[:, 3 * H:4 * H])
                i_g = sig[:, 0 * H:1 * H]
                f_g = sig[:, 1 * H:2 * H]
                o_g = sig[:, 2 * H:3 * H]
                c = f_g * c + i_g * g_g
                h = o_g * jnp.tanh(c)
                if store_seq:
                    # aligned full-tile store: next layer's hoisted matmul input
                    seq_ref[t * B_pad:(t + 1) * B_pad, :] = h
            h_last = h

        # Final Linear on the last timestep's hidden state (real rows only).
        fc_w = fc_ref[0:H, :].astype(bf16)                    # (H, O)
        fc_b = fc_ref[H:H + 1, :]                             # (1, O) f32
        out = jnp.dot(h_last.astype(bf16), fc_w,
                      preferred_element_type=f32) + fc_b       # (B_pad, O)
        out_ref[...] = out[0:B, :].astype(out_ref.dtype)

    return kernel


def pack_params(params, *, input_size, hidden_size, num_layers, output_size):
    """One-time weight layout prep (do at init, not per forward call).

    - rows permuted from torch gate order (i, f, g, o) -> (i, f, o, g)
    - weights transposed so the kernel does (rows, K) @ (K, 4H)
    - b_ih + b_hh combined into a single bias row
    - layer-0 w_ih zero-padded from (I, 4H) to (H, 4H)
    - everything packed into 2 arrays: (L, 2H+1, 4H) and (H+1, O)
    """
    H = hidden_size
    assert input_size <= H, "layer-0 w_ih is zero-padded to H rows"
    perm = jnp.concatenate([
        jnp.arange(0 * H, 1 * H),   # i
        jnp.arange(1 * H, 2 * H),   # f
        jnp.arange(3 * H, 4 * H),   # o
        jnp.arange(2 * H, 3 * H),   # g
    ])
    slabs = []
    for l in range(num_layers):
        w_ih, w_hh, b_ih, b_hh = params[f"lstm_l{l}"]
        in_dim = w_ih.shape[1]
        w_ih_t = jnp.asarray(w_ih, jnp.float32)[perm, :].T            # (in_dim, 4H)
        if in_dim < H:
            w_ih_t = jnp.concatenate(
                [w_ih_t, jnp.zeros((H - in_dim, 4 * H), jnp.float32)], axis=0)
        w_hh_t = jnp.asarray(w_hh, jnp.float32)[perm, :].T            # (H, 4H)
        b = (jnp.asarray(b_ih, jnp.float32)
             + jnp.asarray(b_hh, jnp.float32))[perm].reshape(1, 4 * H)
        slabs.append(jnp.concatenate([w_ih_t, w_hh_t, b], axis=0))    # (2H+1, 4H)
    lstm_p = jnp.stack(slabs, axis=0)                                  # (L, 2H+1, 4H)

    fc_w, fc_b = params["fc"]
    fc_p = jnp.concatenate(
        [jnp.asarray(fc_w, jnp.float32).T,
         jnp.asarray(fc_b, jnp.float32).reshape(1, output_size)], axis=0)  # (H+1, O)
    return lstm_p, fc_p


def task_config_network_forward(x, packed, *, input_size, hidden_size,
                                num_layers, output_size):
    """x: (B, T, input_size) float32, batch_first like the PyTorch module."""
    B, T, I = x.shape
    H = hidden_size
    B_pad = ((B + 7) // 8) * 8          # f32 sublane tile
    lstm_p, fc_p = packed

    # Free reshape (trailing-dim collapse -> bitcast); no transpose / HBM copy.
    x2 = x.reshape(B, T * I).astype(jnp.float32)

    vmem = pl.BlockSpec(memory_space=pltpu.MemorySpace.VMEM)
    kernel = make_lstm_kernel(num_layers, T, B, B_pad, I, H, output_size)

    # TODO(synk): at production batch sizes, add a batch-tile grid with
    # dimension_semantics=("parallel",) so both v7x TensorCores are used.
    return pl.pallas_call(
        kernel,
        out_shape=jax.ShapeDtypeStruct((B, output_size), jnp.float32),
        in_specs=[vmem, vmem, vmem],
        out_specs=vmem,
        scratch_shapes=[
            pltpu.VMEM((T * B_pad, H), jnp.float32),       # hidden/input sequence
            pltpu.VMEM((T * B_pad, 4 * H), jnp.float32),   # hoisted input projection
        ],
    )(x2, lstm_p, fc_p)


def init_params(key, input_size, hidden_size, num_layers, output_size):
    """Deterministic init matching the shapes of nn.LSTM + nn.Linear."""
    params = {}
    H = hidden_size
    bound = 1.0 / math.sqrt(H)
    keys = jax.random.split(key, num_layers * 4 + 2)
    k = 0
    for l in range(num_layers):
        in_dim = input_size if l == 0 else H
        w_ih = jax.random.uniform(keys[k], (4 * H, in_dim),
                                  minval=-bound, maxval=bound); k += 1
        w_hh = jax.random.uniform(keys[k], (4 * H, H),
                                  minval=-bound, maxval=bound); k += 1
        b_ih = jax.random.uniform(keys[k], (4 * H,),
                                  minval=-bound, maxval=bound); k += 1
        b_hh = jax.random.uniform(keys[k], (4 * H,),
                                  minval=-bound, maxval=bound); k += 1
        params[f"lstm_l{l}"] = (w_ih, w_hh, b_ih, b_hh)
    fb = 1.0 / math.sqrt(H)
    fc_w = jax.random.uniform(keys[k], (output_size, H),
                              minval=-fb, maxval=fb); k += 1
    fc_b = jax.random.uniform(keys[k], (output_size,),
                              minval=-fb, maxval=fb)
    params["fc"] = (fc_w, fc_b)
    return params


def reference_forward(x, params, *, hidden_size, num_layers, output_size):
    """Pure-JAX f32 reference implementing torch.nn.LSTM semantics."""
    B, T, _ = x.shape
    H = hidden_size
    seq = x.astype(jnp.float32)
    for l in range(num_layers):
        w_ih, w_hh, b_ih, b_hh = params[f"lstm_l{l}"]
        wi, wh, b = w_ih.T, w_hh.T, (b_ih + b_hh)[None, :]

        def step(carry, x_t):
            h, c = carry
            g = x_t @ wi + h @ wh + b
            i = jax.nn.sigmoid(g[:, 0 * H:1 * H])
            f = jax.nn.sigmoid(g[:, 1 * H:2 * H])
            gg = jnp.tanh(g[:, 2 * H:3 * H])
            o = jax.nn.sigmoid(g[:, 3 * H:4 * H])
            c = f * c + i * gg
            h = o * jnp.tanh(c)
            return (h, c), h

        init = (jnp.zeros((B, H)), jnp.zeros((B, H)))
        _, hs = lax.scan(step, init, jnp.transpose(seq, (1, 0, 2)))
        seq = jnp.transpose(hs, (1, 0, 2))
    fc_w, fc_b = params["fc"]
    return seq[:, -1, :] @ fc_w.T + fc_b[None, :]


if __name__ == "__main__":
    # Small shapes consistent with the module's forward:
    #   batch=2, seq_len=8, input_size=4, hidden_size=32, num_layers=2, output=4
    B, T, I, H, L, O = 2, 8, 4, 32, 2, 4

    key = jax.random.PRNGKey(0)
    kx, kp = jax.random.split(key)
    x = jax.random.normal(kx, (B, T, I), dtype=jnp.float32)
    params = init_params(kp, I, H, L, O)

    # One-time weight layout prep (kept out of the steady-state forward path).
    packed = pack_params(params, input_size=I, hidden_size=H,
                         num_layers=L, output_size=O)
    packed = jax.block_until_ready(packed)

    fwd = jax.jit(functools.partial(task_config_network_forward,
                                    input_size=I, hidden_size=H,
                                    num_layers=L, output_size=O))
    out = jax.block_until_ready(fwd(x, packed))

    ref = reference_forward(x, params, hidden_size=H, num_layers=L,
                            output_size=O)
    assert out.shape == (B, O)
    # bf16 MXU operands (f32 accumulation / gate math) -> loosened tolerance
    # vs. the pure-f32 reference.
    assert jnp.allclose(out, ref, atol=5e-2, rtol=5e-2), (out, ref)

    print("KERNEL_OK")
</pallas_src>

<mosaic_0001>
module attributes {stable_mosaic.version = 11 : i64} {
  func.func @kernel(%arg0: memref<2x32xf32, #tpu.memory_space<vmem>>, %arg1: memref<2x65x128xf32, #tpu.memory_space<vmem>>, %arg2: memref<33x4xf32, #tpu.memory_space<vmem>>, %arg3: memref<2x4xf32, #tpu.memory_space<vmem>>, %arg4: memref<64x32xf32, #tpu.memory_space<vmem>>, %arg5: memref<64x128xf32, #tpu.memory_space<vmem>>) attributes {dimension_semantics = [], scalar_prefetch = 0 : i64, scratch_operands = 2 : i64, tpu.core_type = #tpu.core_type<tc>} {
    %cst = arith.constant 0.000000e+00 : f32
    %0 = vector.broadcast %cst : f32 to vector<64x32xf32>
    %c0 = arith.constant 0 : index
    %c0_0 = arith.constant 0 : index
    %1 = vector.load %arg4[%c0, %c0_0] : memref<64x32xf32, #tpu.memory_space<vmem>>, vector<64x32xf32>
    tpu.vector_store %arg4[%c0, %c0_0], %0 {strides = array<i32>} : memref<64x32xf32, #tpu.memory_space<vmem>>, vector<64x32xf32>,
    %c0_1 = arith.constant 0 : index
    %c0_2 = arith.constant 0 : index
    %2 = vector.load %arg0[%c0_1, %c0_2] : memref<2x32xf32, #tpu.memory_space<vmem>>, vector<2x32xf32>
    %3 = vector.extract_strided_slice %2 {offsets = [0, 0], sizes = [2, 4], strides = [1, 1]} : vector<2x32xf32> to vector<2x4xf32>
    %c0_3 = arith.constant 0 : index
    %c0_4 = arith.constant 0 : index
    %4 = vector.load %arg4[%c0_3, %c0_4] : memref<64x32xf32, #tpu.memory_space<vmem>>, vector<2x4xf32>
    tpu.vector_store %arg4[%c0_3, %c0_4], %3 {strides = array<i32>} : memref<64x32xf32, #tpu.memory_space<vmem>>, vector<2x4xf32>,
    %5 = vector.extract_strided_slice %2 {offsets = [0, 4], sizes = [2, 4], strides = [1, 1]} : vector<2x32xf32> to vector<2x4xf32>
    %c8 = arith.constant 8 : index
    %c0_5 = arith.constant 0 : index
    %6 = vector.load %arg4[%c8, %c0_5] : memref<64x32xf32, #tpu.memory_space<vmem>>, vector<2x4xf32>
    tpu.vector_store %arg4[%c8, %c0_5], %5 {strides = array<i32>} : memref<64x32xf32, #tpu.memory_space<vmem>>, vector<2x4xf32>,
    %7 = vector.extract_strided_slice %2 {offsets = [0, 8], sizes = [2, 4], strides = [1, 1]} : vector<2x32xf32> to vector<2x4xf32>
    %c16 = arith.constant 16 : index
    %c0_6 = arith.constant 0 : index
    %8 = vector.load %arg4[%c16, %c0_6] : memref<64x32xf32, #tpu.memory_space<vmem>>, vector<2x4xf32>
    tpu.vector_store %arg4[%c16, %c0_6], %7 {strides = array<i32>} : memref<64x32xf32, #tpu.memory_space<vmem>>, vector<2x4xf32>,
    %9 = vector.extract_strided_slice %2 {offsets = [0, 12], sizes = [2, 4], strides = [1, 1]} : vector<2x32xf32> to vector<2x4xf32>
    %c24 = arith.constant 24 : index
    %c0_7 = arith.constant 0 : index
    %10 = vector.load %arg4[%c24, %c0_7] : memref<64x32xf32, #tpu.memory_space<vmem>>, vector<2x4xf32>
    tpu.vector_store %arg4[%c24, %c0_7], %9 {strides = array<i32>} : memref<64x32xf32, #tpu.memory_space<vmem>>, vector<2x4xf32>,
    %11 = vector.extract_strided_slice %2 {offsets = [0, 16], sizes = [2, 4], strides = [1, 1]} : vector<2x32xf32> to vector<2x4xf32>
    %c32 = arith.constant 32 : index
    %c0_8 = arith.constant 0 : index
    %12 = vector.load %arg4[%c32, %c0_8] : memref<64x32xf32, #tpu.memory_space<vmem>>, vector<2x4xf32>
    tpu.vector_store %arg4[%c32, %c0_8], %11 {strides = array<i32>} : memref<64x32xf32, #tpu.memory_space<vmem>>, vector<2x4xf32>,
    %13 = vector.extract_strided_slice %2 {offsets = [0, 20], sizes = [2, 4], strides = [1, 1]} : vector<2x32xf32> to vector<2x4xf32>
    %c40 = arith.constant 40 : index
    %c0_9 = arith.constant 0 : index
    %14 = vector.load %arg4[%c40, %c0_9] : memref<64x32xf32, #tpu.memory_space<vmem>>, vector<2x4xf32>
    tpu.vector_store %arg4[%c40, %c0_9], %13 {strides = array<i32>} : memref<64x32xf32, #tpu.memory_space<vmem>>, vector<2x4xf32>,
    %15 = vector.extract_strided_slice %2 {offsets = [0, 24], sizes = [2, 4], strides = [1, 1]} : vector<2x32xf32> to vector<2x4xf32>
    %c48 = arith.constant 48 : index
    %c0_10 = arith.constant 0 : index
    %16 = vector.load %arg4[%c48, %c0_10] : memref<64x32xf32, #tpu.memory_space<vmem>>, vector<2x4xf32>
    tpu.vector_store %arg4[%c48, %c0_10], %15 {strides = array<i32>} : memref<64x32xf32, #tpu.memory_space<vmem>>, vector<2x4xf32>,
    %17 = vector.extract_strided_slice %2 {offsets = [0, 28], sizes = [2, 4], strides = [1, 1]} : vector<2x32xf32> to vector<2x4xf32>
    %c56 = arith.constant 56 : index
    %c0_11 = arith.constant 0 : index
    %18 = vector.load %arg4[%c56, %c0_11] : memref<64x32xf32, #tpu.memory_space<vmem>>, vector<2x4xf32>
    tpu.vector_store %arg4[%c56, %c0_11], %17 {strides = array<i32>} : memref<64x32xf32, #tpu.memory_space<vmem>>, vector<2x4xf32>,
    %c0_12 = arith.constant 0 : index
    %c0_13 = arith.constant 0 : index
    %c0_14 = arith.constant 0 : index
    %19 = vector.load %arg1[%c0_12, %c0_13, %c0_14] : memref<2x65x128xf32, #tpu.memory_space<vmem>>, vector<1x65x128xf32>
    %20 = vector.shape_cast %19 : vector<1x65x128xf32> to vector<65x128xf32>
    %21 = vector.extract_strided_slice %20 {offsets = [0, 0], sizes = [32, 128], strides = [1, 1]} : vector<65x128xf32> to vector<32x128xf32>
    %22 = arith.truncf %21 : vector<32x128xf32> to vector<32x128xbf16>
    %23 = vector.extract_strided_slice %20 {offsets = [32, 0], sizes = [32, 128], strides = [1, 1]} : vector<65x128xf32> to vector<32x128xf32>
    %24 = arith.truncf %23 : vector<32x128xf32> to vector<32x128xbf16>
    %25 = vector.extract_strided_slice %20 {offsets = [64, 0], sizes = [1, 128], strides = [1, 1]} : vector<65x128xf32> to vector<1x128xf32>
    %c0_15 = arith.constant 0 : index
    %c0_16 = arith.constant 0 : index
    %26 = vector.load %arg4[%c0_15, %c0_16] : memref<64x32xf32, #tpu.memory_space<vmem>>, vector<64x32xf32>
    %27 = arith.truncf %26 : vector<64x32xf32> to vector<64x32xbf16>
    %cst_17 = arith.constant dense<0.000000e+00> : vector<64x128xf32>
    %28 = tpu.matmul %27, %22, %cst_17 {dimension_numbers = #tpu.dot_dimension_numbers<[1], [0], [0], [1], [0, 0, 1, 1], [], []>} : vector<64x32xbf16>, vector<32x128xbf16>, vector<64x128xf32> -> vector<64x128xf32>
    %29 = vector.broadcast %25 : vector<1x128xf32> to vector<64x128xf32>
    %30 = arith.addf %28, %29 : vector<64x128xf32>
    %c0_18 = arith.constant 0 : index
    %c0_19 = arith.constant 0 : index
    %31 = vector.load %arg5[%c0_18, %c0_19] : memref<64x128xf32, #tpu.memory_space<vmem>>, vector<64x128xf32>
    tpu.vector_store %arg5[%c0_18, %c0_19], %30 {strides = array<i32>} : memref<64x128xf32, #tpu.memory_space<vmem>>, vector<64x128xf32>,
    %cst_20 = arith.constant 0.000000e+00 : f32
    %32 = vector.broadcast %cst_20 : f32 to vector<8x32xf32>
    %cst_21 = arith.constant 0.000000e+00 : f32
    %33 = vector.broadcast %cst_21 : f32 to vector<8x32xf32>
    %c0_22 = arith.constant 0 : index
    %c0_23 = arith.constant 0 : index
    %34 = vector.load %arg5[%c0_22, %c0_23] : memref<64x128xf32, #tpu.memory_space<vmem>>, vector<8x128xf32>
    %35 = arith.truncf %32 : vector<8x32xf32> to vector<8x32xbf16>
    %cst_24 = arith.constant dense<0.000000e+00> : vector<8x128xf32>
    %36 = tpu.matmul %35, %24, %cst_24 {dimension_numbers = #tpu.dot_dimension_numbers<[1], [0], [0], [1], [0, 0, 1, 1], [], []>} : vector<8x32xbf16>, vector<32x128xbf16>, vector<8x128xf32> -> vector<8x128xf32>
    %37 = arith.addf %34, %36 : vector<8x128xf32>
    %38 = vector.extract_strided_slice %37 {offsets = [0, 0], sizes = [8, 96], strides = [1, 1]} : vector<8x128xf32> to vector<8x96xf32>
    %39 = arith.negf %38 : vector<8x96xf32>
    %40 = math.exp %39 : vector<8x96xf32>
    %cst_25 = arith.constant 1.000000e+00 : f32
    %41 = vector.broadcast %cst_25 : f32 to vector<8x96xf32>
    %42 = arith.addf %41, %40 : vector<8x96xf32>
    %43 = arith.divf %41, %42 : vector<8x96xf32>
    %44 = vector.extract_strided_slice %37 {offsets = [0, 96], sizes = [8, 32], strides = [1, 1]} : vector<8x128xf32> to vector<8x32xf32>
    %45 = math.tanh %44 : vector<8x32xf32>
    %46 = vector.extract_strided_slice %43 {offsets = [0, 0], sizes = [8, 32], strides = [1, 1]} : vector<8x96xf32> to vector<8x32xf32>
    %47 = vector.extract_strided_slice %43 {offsets = [0, 32], sizes = [8, 32], strides = [1, 1]} : vector<8x96xf32> to vector<8x32xf32>
    %48 = vector.extract_strided_slice %43 {offsets = [0, 64], sizes = [8, 32], strides = [1, 1]} : vector<8x96xf32> to vector<8x32xf32>
    %49 = arith.mulf %47, %33 : vector<8x32xf32>
    %50 = arith.mulf %46, %45 : vector<8x32xf32>
    %51 = arith.addf %49, %50 : vector<8x32xf32>
    %52 = math.tanh %51 : vector<8x32xf32>
    %53 = arith.mulf %48, %52 : vector<8x32xf32>
    %c0_26 = arith.constant 0 : index
    %c0_27 = arith.constant 0 : index
    %54 = vector.load %arg4[%c0_26, %c0_27] : memref<64x32xf32, #tpu.memory_space<vmem>>, vector<8x32xf32>
    tpu.vector_store %arg4[%c0_26, %c0_27], %53 {strides = array<i32>} : memref<64x32xf32, #tpu.memory_space<vmem>>, vector<8x32xf32>,
    %c8_28 = arith.constant 8 : index
    %c0_29 = arith.constant 0 : index
    %55 = vector.load %arg5[%c8_28, %c0_29] : memref<64x128xf32, #tpu.memory_space<vmem>>, vector<8x128xf32>
    %56 = arith.truncf %53 : vector<8x32xf32> to vector<8x32xbf16>
    %cst_30 = arith.constant dense<0.000000e+00> : vector<8x128xf32>
    %57 = tpu.matmul %56, %24, %cst_30 {dimension_numbers = #tpu.dot_dimension_numbers<[1], [0], [0], [1], [0, 0, 1, 1], [], []>} : vector<8x32xbf16>, vector<32x128xbf16>, vector<8x128xf32> -> vector<8x128xf32>
    %58 = arith.addf %55, %57 : vector<8x128xf32>
    %59 = vector.extract_strided_slice %58 {offsets = [0, 0], sizes = [8, 96], strides = [1, 1]} : vector<8x128xf32> to vector<8x96xf32>
    %60 = arith.negf %59 : vector<8x96xf32>
    %61 = math.exp %60 : vector<8x96xf32>
    %cst_31 = arith.constant 1.000000e+00 : f32
    %62 = vector.broadcast %cst_31 : f32 to vector<8x96xf32>
    %63 = arith.addf %62, %61 : vector<8x96xf32>
    %64 = arith.divf %62, %63 : vector<8x96xf32>
    %65 = vector.extract_strided_slice %58 {offsets = [0, 96], sizes = [8, 32], strides = [1, 1]} : vector<8x128xf32> to vector<8x32xf32>
    %66 = math.tanh %65 : vector<8x32xf32>
    %67 = vector.extract_strided_slice %64 {offsets = [0, 0], sizes = [8, 32], strides = [1, 1]} : vector<8x96xf32> to vector<8x32xf32>
    %68 = vector.extract_strided_slice %64 {offsets = [0, 32], sizes = [8, 32], strides = [1, 1]} : vector<8x96xf32> to vector<8x32xf32>
    %69 = vector.extract_strided_slice %64 {offsets = [0, 64], sizes = [8, 32], strides = [1, 1]} : vector<8x96xf32> to vector<8x32xf32>
    %70 = arith.mulf %68, %51 : vector<8x32xf32>
    %71 = arith.mulf %67, %66 : vector<8x32xf32>
    %72 = arith.addf %70, %71 : vector<8x32xf32>
    %73 = math.tanh %72 : vector<8x32xf32>
    %74 = arith.mulf %69, %73 : vector<8x32xf32>
    %c8_32 = arith.constant 8 : index
    %c0_33 = arith.constant 0 : index
    %75 = vector.load %arg4[%c8_32, %c0_33] : memref<64x32xf32, #tpu.memory_space<vmem>>, vector<8x32xf32>
    tpu.vector_store %arg4[%c8_32, %c0_33], %74 {strides = array<i32>} : memref<64x32xf32, #tpu.memory_space<vmem>>, vector<8x32xf32>,
    %c16_34 = arith.constant 16 : index
    %c0_35 = arith.constant 0 : index
    %76 = vector.load %arg5[%c16_34, %c0_35] : memref<64x128xf32, #tpu.memory_space<vmem>>, vector<8x128xf32>
    %77 = arith.truncf %74 : vector<8x32xf32> to vector<8x32xbf16>
    %cst_36 = arith.constant dense<0.000000e+00> : vector<8x128xf32>
    %78 = tpu.matmul %77, %24, %cst_36 {dimension_numbers = #tpu.dot_dimension_numbers<[1], [0], [0], [1], [0, 0, 1, 1], [], []>} : vector<8x32xbf16>, vector<32x128xbf16>, vector<8x128xf32> -> vector<8x128xf32>
    %79 = arith.addf %76, %78 : vector<8x128xf32>
    %80 = vector.extract_strided_slice %79 {offsets = [0, 0], sizes = [8, 96], strides = [1, 1]} : vector<8x128xf32> to vector<8x96xf32>
    %81 = arith.negf %80 : vector<8x96xf32>
    %82 = math.exp %81 : vector<8x96xf32>
    %cst_37 = arith.constant 1.000000e+00 : f32
    %83 = vector.broadcast %cst_37 : f32 to vector<8x96xf32>
    %84 = arith.addf %83, %82 : vector<8x96xf32>
    %85 = arith.divf %83, %84 : vector<8x96xf32>
    %86 = vector.extract_strided_slice %79 {offsets = [0, 96], sizes = [8, 32], strides = [1, 1]} : vector<8x128xf32> to vector<8x32xf32>
    %87 = math.tanh %86 : vector<8x32xf32>
    %88 = vector.extract_strided_slice %85 {offsets = [0, 0], sizes = [8, 32], strides = [1, 1]} : vector<8x96xf32> to vector<8x32xf32>
    %89 = vector.extract_strided_slice %85 {offsets = [0, 32], sizes = [8, 32], strides = [1, 1]} : vector<8x96xf32> to vector<8x32xf32>
    %90 = vector.extract_strided_slice %85 {offsets = [0, 64], sizes = [8, 32], strides = [1, 1]} : vector<8x96xf32> to vector<8x32xf32>
    %91 = arith.mulf %89, %72 : vector<8x32xf32>
    %92 = arith.mulf %88, %87 : vector<8x32xf32>
    %93 = arith.addf %91, %92 : vector<8x32xf32>
    %94 = math.tanh %93 : vector<8x32xf32>
    %95 = arith.mulf %90, %94 : vector<8x32xf32>
    %c16_38 = arith.constant 16 : index
    %c0_39 = arith.constant 0 : index
    %96 = vector.load %arg4[%c16_38, %c0_39] : memref<64x32xf32, #tpu.memory_space<vmem>>, vector<8x32xf32>
    tpu.vector_store %arg4[%c16_38, %c0_39], %95 {strides = array<i32>} : memref<64x32xf32, #tpu.memory_space<vmem>>, vector<8x32xf32>,
    %c24_40 = arith.constant 24 : index
    %c0_41 = arith.constant 0 : index
    %97 = vector.load %arg5[%c24_40, %c0_41] : memref<64x128xf32, #tpu.memory_space<vmem>>, vector<8x128xf32>
    %98 = arith.truncf %95 : vector<8x32xf32> to vector<8x32xbf16>
    %cst_42 = arith.constant dense<0.000000e+00> : vector<8x128xf32>
    %99 = tpu.matmul %98, %24, %cst_42 {dimension_numbers = #tpu.dot_dimension_numbers<[1], [0], [0], [1], [0, 0, 1, 1], [], []>} : vector<8x32xbf16>, vector<32x128xbf16>, vector<8x128xf32> -> vector<8x128xf32>
    %100 = arith.addf %97, %99 : vector<8x128xf32>
    %101 = vector.extract_strided_slice %100 {offsets = [0, 0], sizes = [8, 96], strides = [1, 1]} : vector<8x128xf32> to vector<8x96xf32>
    %102 = arith.negf %101 : vector<8x96xf32>
    %103 = math.exp %102 : vector<8x96xf32>
    %cst_43 = arith.constant 1.000000e+00 : f32
    %104 = vector.broadcast %cst_43 : f32 to vector<8x96xf32>
    %105 = arith.addf %104, %103 : vector<8x96xf32>
    %106 = arith.divf %104, %105 : vector<8x96xf32>
    %107 = vector.extract_strided_slice %100 {offsets = [0, 96], sizes = [8, 32], strides = [1, 1]} : vector<8x128xf32> to vector<8x32xf32>
    %108 = math.tanh %107 : vector<8x32xf32>
    %109 = vector.extract_strided_slice %106 {offsets = [0, 0], sizes = [8, 32], strides = [1, 1]} : vector<8x96xf32> to vector<8x32xf32>
    %110 = vector.extract_strided_slice %106 {offsets = [0, 32], sizes = [8, 32], strides = [1, 1]} : vector<8x96xf32> to vector<8x32xf32>
    %111 = vector.extract_strided_slice %106 {offsets = [0, 64], sizes = [8, 32], strides = [1, 1]} : vector<8x96xf32> to vector<8x32xf32>
    %112 = arith.mulf %110, %93 : vector<8x32xf32>
    %113 = arith.mulf %109, %108 : vector<8x32xf32>
    %114 = arith.addf %112, %113 : vector<8x32xf32>
    %115 = math.tanh %114 : vector<8x32xf32>
    %116 = arith.mulf %111, %115 : vector<8x32xf32>
    %c24_44 = arith.constant 24 : index
    %c0_45 = arith.constant 0 : index
    %117 = vector.load %arg4[%c24_44, %c0_45] : memref<64x32xf32, #tpu.memory_space<vmem>>, vector<8x32xf32>
    tpu.vector_store %arg4[%c24_44, %c0_45], %116 {strides = array<i32>} : memref<64x32xf32, #tpu.memory_space<vmem>>, vector<8x32xf32>,
    %c32_46 = arith.constant 32 : index
    %c0_47 = arith.constant 0 : index
    %118 = vector.load %arg5[%c32_46, %c0_47] : memref<64x128xf32, #tpu.memory_space<vmem>>, vector<8x128xf32>
    %119 = arith.truncf %116 : vector<8x32xf32> to vector<8x32xbf16>
    %cst_48 = arith.constant dense<0.000000e+00> : vector<8x128xf32>
    %120 = tpu.matmul %119, %24, %cst_48 {dimension_numbers = #tpu.dot_dimension_numbers<[1], [0], [0], [1], [0, 0, 1, 1], [], []>} : vector<8x32xbf16>, vector<32x128xbf16>, vector<8x128xf32> -> vector<8x128xf32>
    %121 = arith.addf %118, %120 : vector<8x128xf32>
    %122 = vector.extract_strided_slice %121 {offsets = [0, 0], sizes = [8, 96], strides = [1, 1]} : vector<8x128xf32> to vector<8x96xf32>
    %123 = arith.negf %122 : vector<8x96xf32>
    %124 = math.exp %123 : vector<8x96xf32>
    %cst_49 = arith.constant 1.000000e+00 : f32
    %125 = vector.broadcast %cst_49 : f32 to vector<8x96xf32>
    %126 = arith.addf %125, %124 : vector<8x96xf32>
    %127 = arith.divf %125, %126 : vector<8x96xf32>
    %128 = vector.extract_strided_slice %121 {offsets = [0, 96], sizes = [8, 32], strides = [1, 1]} : vector<8x128xf32> to vector<8x32xf32>
    %129 = math.tanh %128 : vector<8x32xf32>
    %130 = vector.extract_strided_slice %127 {offsets = [0, 0], sizes = [8, 32], strides = [1, 1]} : vector<8x96xf32> to vector<8x32xf32>
    %131 = vector.extract_strided_slice %127 {offsets = [0, 32], sizes = [8, 32], strides = [1, 1]} : vector<8x96xf32> to vector<8x32xf32>
    %132 = vector.extract_strided_slice %127 {offsets = [0, 64], sizes = [8, 32], strides = [1, 1]} : vector<8x96xf32> to vector<8x32xf32>
    %133 = arith.mulf %131, %114 : vector<8x32xf32>
    %134 = arith.mulf %130, %129 : vector<8x32xf32>
    %135 = arith.addf %133, %134 : vector<8x32xf32>
    %136 = math.tanh %135 : vector<8x32xf32>
    %137 = arith.mulf %132, %136 : vector<8x32xf32>
    %c32_50 = arith.constant 32 : index
    %c0_51 = arith.constant 0 : index
    %138 = vector.load %arg4[%c32_50, %c0_51] : memref<64x32xf32, #tpu.memory_space<vmem>>, vector<8x32xf32>
    tpu.vector_store %arg4[%c32_50, %c0_51], %137 {strides = array<i32>} : memref<64x32xf32, #tpu.memory_space<vmem>>, vector<8x32xf32>,
    %c40_52 = arith.constant 40 : index
    %c0_53 = arith.constant 0 : index
    %139 = vector.load %arg5[%c40_52, %c0_53] : memref<64x128xf32, #tpu.memory_space<vmem>>, vector<8x128xf32>
    %140 = arith.truncf %137 : vector<8x32xf32> to vector<8x32xbf16>
    %cst_54 = arith.constant dense<0.000000e+00> : vector<8x128xf32>
    %141 = tpu.matmul %140, %24, %cst_54 {dimension_numbers = #tpu.dot_dimension_numbers<[1], [0], [0], [1], [0, 0, 1, 1], [], []>} : vector<8x32xbf16>, vector<32x128xbf16>, vector<8x128xf32> -> vector<8x128xf32>
    %142 = arith.addf %139, %141 : vector<8x128xf32>
    %143 = vector.extract_strided_slice %142 {offsets = [0, 0], sizes = [8, 96], strides = [1, 1]} : vector<8x128xf32> to vector<8x96xf32>
    %144 = arith.negf %143 : vector<8x96xf32>
    %145 = math.exp %144 : vector<8x96xf32>
    %cst_55 = arith.constant 1.000000e+00 : f32
    %146 = vector.broadcast %cst_55 : f32 to vector<8x96xf32>
    %147 = arith.addf %146, %145 : vector<8x96xf32>
    %148 = arith.divf %146, %147 : vector<8x96xf32>
    %149 = vector.extract_strided_slice %142 {offsets = [0, 96], sizes = [8, 32], strides = [1, 1]} : vector<8x128xf32> to vector<8x32xf32>
    %150 = math.tanh %149 : vector<8x32xf32>
    %151 = vector.extract_strided_slice %148 {offsets = [0, 0], sizes = [8, 32], strides = [1, 1]} : vector<8x96xf32> to vector<8x32xf32>
    %152 = vector.extract_strided_slice %148 {offsets = [0, 32], sizes = [8, 32], strides = [1, 1]} : vector<8x96xf32> to vector<8x32xf32>
    %153 = vector.extract_strided_slice %148 {offsets = [0, 64], sizes = [8, 32], strides = [1, 1]} : vector<8x96xf32> to vector<8x32xf32>
    %154 = arith.mulf %152, %135 : vector<8x32xf32>
    %155 = arith.mulf %151, %150 : vector<8x32xf32>
    %156 = arith.addf %154, %155 : vector<8x32xf32>
    %157 = math.tanh %156 : vector<8x32xf32>
    %158 = arith.mulf %153, %157 : vector<8x32xf32>
    %c40_56 = arith.constant 40 : index
    %c0_57 = arith.constant 0 : index
    %159 = vector.load %arg4[%c40_56, %c0_57] : memref<64x32xf32, #tpu.memory_space<vmem>>, vector<8x32xf32>
    tpu.vector_store %arg4[%c40_56, %c0_57], %158 {strides = array<i32>} : memref<64x32xf32, #tpu.memory_space<vmem>>, vector<8x32xf32>,
    %c48_58 = arith.constant 48 : index
    %c0_59 = arith.constant 0 : index
    %160 = vector.load %arg5[%c48_58, %c0_59] : memref<64x128xf32, #tpu.memory_space<vmem>>, vector<8x128xf32>
    %161 = arith.truncf %158 : vector<8x32xf32> to vector<8x32xbf16>
    %cst_60 = arith.constant dense<0.000000e+00> : vector<8x128xf32>
    %162 = tpu.matmul %161, %24, %cst_60 {dimension_numbers = #tpu.dot_dimension_numbers<[1], [0], [0], [1], [0, 0, 1, 1], [], []>} : vector<8x32xbf16>, vector<32x128xbf16>, vector<8x128xf32> -> vector<8x128xf32>
    %163 = arith.addf %160, %162 : vector<8x128xf32>
    %164 = vector.extract_strided_slice %163 {offsets = [0, 0], sizes = [8, 96], strides = [1, 1]} : vector<8x128xf32> to vector<8x96xf32>
    %165 = arith.negf %164 : vector<8x96xf32>
    %166 = math.exp %165 : vector<8x96xf32>
    %cst_61 = arith.constant 1.000000e+00 : f32
    %167 = vector.broadcast %cst_61 : f32 to vector<8x96xf32>
    %168 = arith.addf %167, %166 : vector<8x96xf32>
    %169 = arith.divf %167, %168 : vector<8x96xf32>
    %170 = vector.extract_strided_slice %163 {offsets = [0, 96], sizes = [8, 32], strides = [1, 1]} : vector<8x128xf32> to vector<8x32xf32>
    %171 = math.tanh %170 : vector<8x32xf32>
    %172 = vector.extract_strided_slice %169 {offsets = [0, 0], sizes = [8, 32], strides = [1, 1]} : vector<8x96xf32> to vector<8x32xf32>
    %173 = vector.extract_strided_slice %169 {offsets = [0, 32], sizes = [8, 32], strides = [1, 1]} : vector<8x96xf32> to vector<8x32xf32>
    %174 = vector.extract_strided_slice %169 {offsets = [0, 64], sizes = [8, 32], strides = [1, 1]} : vector<8x96xf32> to vector<8x32xf32>
    %175 = arith.mulf %173, %156 : vector<8x32xf32>
    %176 = arith.mulf %172, %171 : vector<8x32xf32>
    %177 = arith.addf %175, %176 : vector<8x32xf32>
    %178 = math.tanh %177 : vector<8x32xf32>
    %179 = arith.mulf %174, %178 : vector<8x32xf32>
    %c48_62 = arith.constant 48 : index
    %c0_63 = arith.constant 0 : index
    %180 = vector.load %arg4[%c48_62, %c0_63] : memref<64x32xf32, #tpu.memory_space<vmem>>, vector<8x32xf32>
    tpu.vector_store %arg4[%c48_62, %c0_63], %179 {strides = array<i32>} : memref<64x32xf32, #tpu.memory_space<vmem>>, vector<8x32xf32>,
    %c56_64 = arith.constant 56 : index
    %c0_65 = arith.constant 0 : index
    %181 = vector.load %arg5[%c56_64, %c0_65] : memref<64x128xf32, #tpu.memory_space<vmem>>, vector<8x128xf32>
    %182 = arith.truncf %179 : vector<8x32xf32> to vector<8x32xbf16>
    %cst_66 = arith.constant dense<0.000000e+00> : vector<8x128xf32>
    %183 = tpu.matmul %182, %24, %cst_66 {dimension_numbers = #tpu.dot_dimension_numbers<[1], [0], [0], [1], [0, 0, 1, 1], [], []>} : vector<8x32xbf16>, vector<32x128xbf16>, vector<8x128xf32> -> vector<8x128xf32>
    %184 = arith.addf %181, %183 : vector<8x128xf32>
    %185 = vector.extract_strided_slice %184 {offsets = [0, 0], sizes = [8, 96], strides = [1, 1]} : vector<8x128xf32> to vector<8x96xf32>
    %186 = arith.negf %185 : vector<8x96xf32>
    %187 = math.exp %186 : vector<8x96xf32>
    %cst_67 = arith.constant 1.000000e+00 : f32
    %188 = vector.broadcast %cst_67 : f32 to vector<8x96xf32>
    %189 = arith.addf %188, %187 : vector<8x96xf32>
    %190 = arith.divf %188, %189 : vector<8x96xf32>
    %191 = vector.extract_strided_slice %184 {offsets = [0, 96], sizes = [8, 32], strides = [1, 1]} : vector<8x128xf32> to vector<8x32xf32>
    %192 = math.tanh %191 : vector<8x32xf32>
    %193 = vector.extract_strided_slice %190 {offsets = [0, 0], sizes = [8, 32], strides = [1, 1]} : vector<8x96xf32> to vector<8x32xf32>
    %194 = vector.extract_strided_slice %190 {offsets = [0, 32], sizes = [8, 32], strides = [1, 1]} : vector<8x96xf32> to vector<8x32xf32>
    %195 = vector.extract_strided_slice %190 {offsets = [0, 64], sizes = [8, 32], strides = [1, 1]} : vector<8x96xf32> to vector<8x32xf32>
    %196 = arith.mulf %194, %177 : vector<8x32xf32>
    %197 = arith.mulf %193, %192 : vector<8x32xf32>
    %198 = arith.addf %196, %197 : vector<8x32xf32>
    %199 = math.tanh %198 : vector<8x32xf32>
    %200 = arith.mulf %195, %199 : vector<8x32xf32>
    %c56_68 = arith.constant 56 : index
    %c0_69 = arith.constant 0 : index
    %201 = vector.load %arg4[%c56_68, %c0_69] : memref<64x32xf32, #tpu.memory_space<vmem>>, vector<8x32xf32>
    tpu.vector_store %arg4[%c56_68, %c0_69], %200 {strides = array<i32>} : memref<64x32xf32, #tpu.memory_space<vmem>>, vector<8x32xf32>,
    %c1 = arith.constant 1 : index
    %c0_70 = arith.constant 0 : index
    %c0_71 = arith.constant 0 : index
    %202 = vector.load %arg1[%c1, %c0_70, %c0_71] : memref<2x65x128xf32, #tpu.memory_space<vmem>>, vector<1x65x128xf32>
    %203 = vector.shape_cast %202 : vector<1x65x128xf32> to vector<65x128xf32>
    %204 = vector.extract_strided_slice %203 {offsets = [0, 0], sizes = [32, 128], strides = [1, 1]} : vector<65x128xf32> to vector<32x128xf32>
    %205 = arith.truncf %204 : vector<32x128xf32> to vector<32x128xbf16>
    %206 = vector.extract_strided_slice %203 {offsets = [32, 0], sizes = [32, 128], strides = [1, 1]} : vector<65x128xf32> to vector<32x128xf32>
    %207 = arith.truncf %206 : vector<32x128xf32> to vector<32x128xbf16>
    %208 = vector.extract_strided_slice %203 {offsets = [64, 0], sizes = [1, 128], strides = [1, 1]} : vector<65x128xf32> to vector<1x128xf32>
    %c0_72 = arith.constant 0 : index
    %c0_73 = arith.constant 0 : index
    %209 = vector.load %arg4[%c0_72, %c0_73] : memref<64x32xf32, #tpu.memory_space<vmem>>, vector<64x32xf32>
    %210 = arith.truncf %209 : vector<64x32xf32> to vector<64x32xbf16>
    %cst_74 = arith.constant dense<0.000000e+00> : vector<64x128xf32>
    %211 = tpu.matmul %210, %205, %cst_74 {dimension_numbers = #tpu.dot_dimension_numbers<[1], [0], [0], [1], [0, 0, 1, 1], [], []>} : vector<64x32xbf16>, vector<32x128xbf16>, vector<64x128xf32> -> vector<64x128xf32>
    %212 = vector.broadcast %208 : vector<1x128xf32> to vector<64x128xf32>
    %213 = arith.addf %211, %212 : vector<64x128xf32>
    %c0_75 = arith.constant 0 : index
    %c0_76 = arith.constant 0 : index
    %214 = vector.load %arg5[%c0_75, %c0_76] : memref<64x128xf32, #tpu.memory_space<vmem>>, vector<64x128xf32>
    tpu.vector_store %arg5[%c0_75, %c0_76], %213 {strides = array<i32>} : memref<64x128xf32, #tpu.memory_space<vmem>>, vector<64x128xf32>,
    %cst_77 = arith.constant 0.000000e+00 : f32
    %215 = vector.broadcast %cst_77 : f32 to vector<8x32xf32>
    %cst_78 = arith.constant 0.000000e+00 : f32
    %216 = vector.broadcast %cst_78 : f32 to vector<8x32xf32>
    %c0_79 = arith.constant 0 : index
    %c0_80 = arith.constant 0 : index
    %217 = vector.load %arg5[%c0_79, %c0_80] : memref<64x128xf32, #tpu.memory_space<vmem>>, vector<8x128xf32>
    %218 = arith.truncf %215 : vector<8x32xf32> to vector<8x32xbf16>
    %cst_81 = arith.constant dense<0.000000e+00> : vector<8x128xf32>
    %219 = tpu.matmul %218, %207, %cst_81 {dimension_numbers = #tpu.dot_dimension_numbers<[1], [0], [0], [1], [0, 0, 1, 1], [], []>} : vector<8x32xbf16>, vector<32x128xbf16>, vector<8x128xf32> -> vector<8x128xf32>
    %220 = arith.addf %217, %219 : vector<8x128xf32>
    %221 = vector.extract_strided_slice %220 {offsets = [0, 0], sizes = [8, 96], strides = [1, 1]} : vector<8x128xf32> to vector<8x96xf32>
    %222 = arith.negf %221 : vector<8x96xf32>
    %223 = math.exp %222 : vector<8x96xf32>
    %cst_82 = arith.constant 1.000000e+00 : f32
    %224 = vector.broadcast %cst_82 : f32 to vector<8x96xf32>
    %225 = arith.addf %224, %223 : vector<8x96xf32>
    %226 = arith.divf %224, %225 : vector<8x96xf32>
    %227 = vector.extract_strided_slice %220 {offsets = [0, 96], sizes = [8, 32], strides = [1, 1]} : vector<8x128xf32> to vector<8x32xf32>
    %228 = math.tanh %227 : vector<8x32xf32>
    %229 = vector.extract_strided_slice %226 {offsets = [0, 0], sizes = [8, 32], strides = [1, 1]} : vector<8x96xf32> to vector<8x32xf32>
    %230 = vector.extract_strided_slice %226 {offsets = [0, 32], sizes = [8, 32], strides = [1, 1]} : vector<8x96xf32> to vector<8x32xf32>
    %231 = vector.extract_strided_slice %226 {offsets = [0, 64], sizes = [8, 32], strides = [1, 1]} : vector<8x96xf32> to vector<8x32xf32>
    %232 = arith.mulf %230, %216 : vector<8x32xf32>
    %233 = arith.mulf %229, %228 : vector<8x32xf32>
    %234 = arith.addf %232, %233 : vector<8x32xf32>
    %235 = math.tanh %234 : vector<8x32xf32>
    %236 = arith.mulf %231, %235 : vector<8x32xf32>
    %c8_83 = arith.constant 8 : index
    %c0_84 = arith.constant 0 : index
    %237 = vector.load %arg5[%c8_83, %c0_84] : memref<64x128xf32, #tpu.memory_space<vmem>>, vector<8x128xf32>
    %238 = arith.truncf %236 : vector<8x32xf32> to vector<8x32xbf16>
    %cst_85 = arith.constant dense<0.000000e+00> : vector<8x128xf32>
    %239 = tpu.matmul %238, %207, %cst_85 {dimension_numbers = #tpu.dot_dimension_numbers<[1], [0], [0], [1], [0, 0, 1, 1], [], []>} : vector<8x32xbf16>, vector<32x128xbf16>, vector<8x128xf32> -> vector<8x128xf32>
    %240 = arith.addf %237, %239 : vector<8x128xf32>
    %241 = vector.extract_strided_slice %240 {offsets = [0, 0], sizes = [8, 96], strides = [1, 1]} : vector<8x128xf32> to vector<8x96xf32>
    %242 = arith.negf %241 : vector<8x96xf32>
    %243 = math.exp %242 : vector<8x96xf32>
    %cst_86 = arith.constant 1.000000e+00 : f32
    %244 = vector.broadcast %cst_86 : f32 to vector<8x96xf32>
    %245 = arith.addf %244, %243 : vector<8x96xf32>
    %246 = arith.divf %244, %245 : vector<8x96xf32>
    %247 = vector.extract_strided_slice %240 {offsets = [0, 96], sizes = [8, 32], strides = [1, 1]} : vector<8x128xf32> to vector<8x32xf32>
    %248 = math.tanh %247 : vector<8x32xf32>
    %249 = vector.extract_strided_slice %246 {offsets = [0, 0], sizes = [8, 32], strides = [1, 1]} : vector<8x96xf32> to vector<8x32xf32>
    %250 = vector.extract_strided_slice %246 {offsets = [0, 32], sizes = [8, 32], strides = [1, 1]} : vector<8x96xf32> to vector<8x32xf32>
    %251 = vector.extract_strided_slice %246 {offsets = [0, 64], sizes = [8, 32], strides = [1, 1]} : vector<8x96xf32> to vector<8x32xf32>
    %252 = arith.mulf %250, %234 : vector<8x32xf32>
    %253 = arith.mulf %249, %248 : vector<8x32xf32>
    %254 = arith.addf %252, %253 : vector<8x32xf32>
    %255 = math.tanh %254 : vector<8x32xf32>
    %256 = arith.mulf %251, %255 : vector<8x32xf32>
    %c16_87 = arith.constant 16 : index
    %c0_88 = arith.constant 0 : index
    %257 = vector.load %arg5[%c16_87, %c0_88] : memref<64x128xf32, #tpu.memory_space<vmem>>, vector<8x128xf32>
    %258 = arith.truncf %256 : vector<8x32xf32> to vector<8x32xbf16>
    %cst_89 = arith.constant dense<0.000000e+00> : vector<8x128xf32>
    %259 = tpu.matmul %258, %207, %cst_89 {dimension_numbers = #tpu.dot_dimension_numbers<[1], [0], [0], [1], [0, 0, 1, 1], [], []>} : vector<8x32xbf16>, vector<32x128xbf16>, vector<8x128xf32> -> vector<8x128xf32>
    %260 = arith.addf %257, %259 : vector<8x128xf32>
    %261 = vector.extract_strided_slice %260 {offsets = [0, 0], sizes = [8, 96], strides = [1, 1]} : vector<8x128xf32> to vector<8x96xf32>
    %262 = arith.negf %261 : vector<8x96xf32>
    %263 = math.exp %262 : vector<8x96xf32>
    %cst_90 = arith.constant 1.000000e+00 : f32
    %264 = vector.broadcast %cst_90 : f32 to vector<8x96xf32>
    %265 = arith.addf %264, %263 : vector<8x96xf32>
    %266 = arith.divf %264, %265 : vector<8x96xf32>
    %267 = vector.extract_strided_slice %260 {offsets = [0, 96], sizes = [8, 32], strides = [1, 1]} : vector<8x128xf32> to vector<8x32xf32>
    %268 = math.tanh %267 : vector<8x32xf32>
    %269 = vector.extract_strided_slice %266 {offsets = [0, 0], sizes = [8, 32], strides = [1, 1]} : vector<8x96xf32> to vector<8x32xf32>
    %270 = vector.extract_strided_slice %266 {offsets = [0, 32], sizes = [8, 32], strides = [1, 1]} : vector<8x96xf32> to vector<8x32xf32>
    %271 = vector.extract_strided_slice %266 {offsets = [0, 64], sizes = [8, 32], strides = [1, 1]} : vector<8x96xf32> to vector<8x32xf32>
    %272 = arith.mulf %270, %254 : vector<8x32xf32>
    %273 = arith.mulf %269, %268 : vector<8x32xf32>
    %274 = arith.addf %272, %273 : vector<8x32xf32>
    %275 = math.tanh %274 : vector<8x32xf32>
    %276 = arith.mulf %271, %275 : vector<8x32xf32>
    %c24_91 = arith.constant 24 : index
    %c0_92 = arith.constant 0 : index
    %277 = vector.load %arg5[%c24_91, %c0_92] : memref<64x128xf32, #tpu.memory_space<vmem>>, vector<8x128xf32>
    %278 = arith.truncf %276 : vector<8x32xf32> to vector<8x32xbf16>
    %cst_93 = arith.constant dense<0.000000e+00> : vector<8x128xf32>
    %279 = tpu.matmul %278, %207, %cst_93 {dimension_numbers = #tpu.dot_dimension_numbers<[1], [0], [0], [1], [0, 0, 1, 1], [], []>} : vector<8x32xbf16>, vector<32x128xbf16>, vector<8x128xf32> -> vector<8x128xf32>
    %280 = arith.addf %277, %279 : vector<8x128xf32>
    %281 = vector.extract_strided_slice %280 {offsets = [0, 0], sizes = [8, 96], strides = [1, 1]} : vector<8x128xf32> to vector<8x96xf32>
    %282 = arith.negf %281 : vector<8x96xf32>
    %283 = math.exp %282 : vector<8x96xf32>
    %cst_94 = arith.constant 1.000000e+00 : f32
    %284 = vector.broadcast %cst_94 : f32 to vector<8x96xf32>
    %285 = arith.addf %284, %283 : vector<8x96xf32>
    %286 = arith.divf %284, %285 : vector<8x96xf32>
    %287 = vector.extract_strided_slice %280 {offsets = [0, 96], sizes = [8, 32], strides = [1, 1]} : vector<8x128xf32> to vector<8x32xf32>
    %288 = math.tanh %287 : vector<8x32xf32>
    %289 = vector.extract_strided_slice %286 {offsets = [0, 0], sizes = [8, 32], strides = [1, 1]} : vector<8x96xf32> to vector<8x32xf32>
    %290 = vector.extract_strided_slice %286 {offsets = [0, 32], sizes = [8, 32], strides = [1, 1]} : vector<8x96xf32> to vector<8x32xf32>
    %291 = vector.extract_strided_slice %286 {offsets = [0, 64], sizes = [8, 32], strides = [1, 1]} : vector<8x96xf32> to vector<8x32xf32>
    %292 = arith.mulf %290, %274 : vector<8x32xf32>
    %293 = arith.mulf %289, %288 : vector<8x32xf32>
    %294 = arith.addf %292, %293 : vector<8x32xf32>
    %295 = math.tanh %294 : vector<8x32xf32>
    %296 = arith.mulf %291, %295 : vector<8x32xf32>
    %c32_95 = arith.constant 32 : index
    %c0_96 = arith.constant 0 : index
    %297 = vector.load %arg5[%c32_95, %c0_96] : memref<64x128xf32, #tpu.memory_space<vmem>>, vector<8x128xf32>
    %298 = arith.truncf %296 : vector<8x32xf32> to vector<8x32xbf16>
    %cst_97 = arith.constant dense<0.000000e+00> : vector<8x128xf32>
    %299 = tpu.matmul %298, %207, %cst_97 {dimension_numbers = #tpu.dot_dimension_numbers<[1], [0], [0], [1], [0, 0, 1, 1], [], []>} : vector<8x32xbf16>, vector<32x128xbf16>, vector<8x128xf32> -> vector<8x128xf32>
    %300 = arith.addf %297, %299 : vector<8x128xf32>
    %301 = vector.extract_strided_slice %300 {offsets = [0, 0], sizes = [8, 96], strides = [1, 1]} : vector<8x128xf32> to vector<8x96xf32>
    %302 = arith.negf %301 : vector<8x96xf32>
    %303 = math.exp %302 : vector<8x96xf32>
    %cst_98 = arith.constant 1.000000e+00 : f32
    %304 = vector.broadcast %cst_98 : f32 to vector<8x96xf32>
    %305 = arith.addf %304, %303 : vector<8x96xf32>
    %306 = arith.divf %304, %305 : vector<8x96xf32>
    %307 = vector.extract_strided_slice %300 {offsets = [0, 96], sizes = [8, 32], strides = [1, 1]} : vector<8x128xf32> to vector<8x32xf32>
    %308 = math.tanh %307 : vector<8x32xf32>
    %309 = vector.extract_strided_slice %306 {offsets = [0, 0], sizes = [8, 32], strides = [1, 1]} : vector<8x96xf32> to vector<8x32xf32>
    %310 = vector.extract_strided_slice %306 {offsets = [0, 32], sizes = [8, 32], strides = [1, 1]} : vector<8x96xf32> to vector<8x32xf32>
    %311 = vector.extract_strided_slice %306 {offsets = [0, 64], sizes = [8, 32], strides = [1, 1]} : vector<8x96xf32> to vector<8x32xf32>
    %312 = arith.mulf %310, %294 : vector<8x32xf32>
    %313 = arith.mulf %309, %308 : vector<8x32xf32>
    %314 = arith.addf %312, %313 : vector<8x32xf32>
    %315 = math.tanh %314 : vector<8x32xf32>
    %316 = arith.mulf %311, %315 : vector<8x32xf32>
    %c40_99 = arith.constant 40 : index
    %c0_100 = arith.constant 0 : index
    %317 = vector.load %arg5[%c40_99, %c0_100] : memref<64x128xf32, #tpu.memory_space<vmem>>, vector<8x128xf32>
    %318 = arith.truncf %316 : vector<8x32xf32> to vector<8x32xbf16>
    %cst_101 = arith.constant dense<0.000000e+00> : vector<8x128xf32>
    %319 = tpu.matmul %318, %207, %cst_101 {dimension_numbers = #tpu.dot_dimension_numbers<[1], [0], [0], [1], [0, 0, 1, 1], [], []>} : vector<8x32xbf16>, vector<32x128xbf16>, vector<8x128xf32> -> vector<8x128xf32>
    %320 = arith.addf %317, %319 : vector<8x128xf32>
    %321 = vector.extract_strided_slice %320 {offsets = [0, 0], sizes = [8, 96], strides = [1, 1]} : vector<8x128xf32> to vector<8x96xf32>
    %322 = arith.negf %321 : vector<8x96xf32>
    %323 = math.exp %322 : vector<8x96xf32>
    %cst_102 = arith.constant 1.000000e+00 : f32
    %324 = vector.broadcast %cst_102 : f32 to vector<8x96xf32>
    %325 = arith.addf %324, %323 : vector<8x96xf32>
    %326 = arith.divf %324, %325 : vector<8x96xf32>
    %327 = vector.extract_strided_slice %320 {offsets = [0, 96], sizes = [8, 32], strides = [1, 1]} : vector<8x128xf32> to vector<8x32xf32>
    %328 = math.tanh %327 : vector<8x32xf32>
    %329 = vector.extract_strided_slice %326 {offsets = [0, 0], sizes = [8, 32], strides = [1, 1]} : vector<8x96xf32> to vector<8x32xf32>
    %330 = vector.extract_strided_slice %326 {offsets = [0, 32], sizes = [8, 32], strides = [1, 1]} : vector<8x96xf32> to vector<8x32xf32>
    %331 = vector.extract_strided_slice %326 {offsets = [0, 64], sizes = [8, 32], strides = [1, 1]} : vector<8x96xf32> to vector<8x32xf32>
    %332 = arith.mulf %330, %314 : vector<8x32xf32>
    %333 = arith.mulf %329, %328 : vector<8x32xf32>
    %334 = arith.addf %332, %333 : vector<8x32xf32>
    %335 = math.tanh %334 : vector<8x32xf32>
    %336 = arith.mulf %331, %335 : vector<8x32xf32>
    %c48_103 = arith.constant 48 : index
    %c0_104 = arith.constant 0 : index
    %337 = vector.load %arg5[%c48_103, %c0_104] : memref<64x128xf32, #tpu.memory_space<vmem>>, vector<8x128xf32>
    %338 = arith.truncf %336 : vector<8x32xf32> to vector<8x32xbf16>
    %cst_105 = arith.constant dense<0.000000e+00> : vector<8x128xf32>
    %339 = tpu.matmul %338, %207, %cst_105 {dimension_numbers = #tpu.dot_dimension_numbers<[1], [0], [0], [1], [0, 0, 1, 1], [], []>} : vector<8x32xbf16>, vector<32x128xbf16>, vector<8x128xf32> -> vector<8x128xf32>
    %340 = arith.addf %337, %339 : vector<8x128xf32>
    %341 = vector.extract_strided_slice %340 {offsets = [0, 0], sizes = [8, 96], strides = [1, 1]} : vector<8x128xf32> to vector<8x96xf32>
    %342 = arith.negf %341 : vector<8x96xf32>
    %343 = math.exp %342 : vector<8x96xf32>
    %cst_106 = arith.constant 1.000000e+00 : f32
    %344 = vector.broadcast %cst_106 : f32 to vector<8x96xf32>
    %345 = arith.addf %344, %343 : vector<8x96xf32>
    %346 = arith.divf %344, %345 : vector<8x96xf32>
    %347 = vector.extract_strided_slice %340 {offsets = [0, 96], sizes = [8, 32], strides = [1, 1]} : vector<8x128xf32> to vector<8x32xf32>
    %348 = math.tanh %347 : vector<8x32xf32>
    %349 = vector.extract_strided_slice %346 {offsets = [0, 0], sizes = [8, 32], strides = [1, 1]} : vector<8x96xf32> to vector<8x32xf32>
    %350 = vector.extract_strided_slice %346 {offsets = [0, 32], sizes = [8, 32], strides = [1, 1]} : vector<8x96xf32> to vector<8x32xf32>
    %351 = vector.extract_strided_slice %346 {offsets = [0, 64], sizes = [8, 32], strides = [1, 1]} : vector<8x96xf32> to vector<8x32xf32>
    %352 = arith.mulf %350, %334 : vector<8x32xf32>
    %353 = arith.mulf %349, %348 : vector<8x32xf32>
    %354 = arith.addf %352, %353 : vector<8x32xf32>
    %355 = math.tanh %354 : vector<8x32xf32>
    %356 = arith.mulf %351, %355 : vector<8x32xf32>
    %c56_107 = arith.constant 56 : index
    %c0_108 = arith.constant 0 : index
    %357 = vector.load %arg5[%c56_107, %c0_108] : memref<64x128xf32, #tpu.memory_space<vmem>>, vector<8x128xf32>
    %358 = arith.truncf %356 : vector<8x32xf32> to vector<8x32xbf16>
    %cst_109 = arith.constant dense<0.000000e+00> : vector<8x128xf32>
    %359 = tpu.matmul %358, %207, %cst_109 {dimension_numbers = #tpu.dot_dimension_numbers<[1], [0], [0], [1], [0, 0, 1, 1], [], []>} : vector<8x32xbf16>, vector<32x128xbf16>, vector<8x128xf32> -> vector<8x128xf32>
    %360 = arith.addf %357, %359 : vector<8x128xf32>
    %361 = vector.extract_strided_slice %360 {offsets = [0, 0], sizes = [8, 96], strides = [1, 1]} : vector<8x128xf32> to vector<8x96xf32>
    %362 = arith.negf %361 : vector<8x96xf32>
    %363 = math.exp %362 : vector<8x96xf32>
    %cst_110 = arith.constant 1.000000e+00 : f32
    %364 = vector.broadcast %cst_110 : f32 to vector<8x96xf32>
    %365 = arith.addf %364, %363 : vector<8x96xf32>
    %366 = arith.divf %364, %365 : vector<8x96xf32>
    %367 = vector.extract_strided_slice %360 {offsets = [0, 96], sizes = [8, 32], strides = [1, 1]} : vector<8x128xf32> to vector<8x32xf32>
    %368 = math.tanh %367 : vector<8x32xf32>
    %369 = vector.extract_strided_slice %366 {offsets = [0, 0], sizes = [8, 32], strides = [1, 1]} : vector<8x96xf32> to vector<8x32xf32>
    %370 = vector.extract_strided_slice %366 {offsets = [0, 32], sizes = [8, 32], strides = [1, 1]} : vector<8x96xf32> to vector<8x32xf32>
    %371 = vector.extract_strided_slice %366 {offsets = [0, 64], sizes = [8, 32], strides = [1, 1]} : vector<8x96xf32> to vector<8x32xf32>
    %372 = arith.mulf %370, %354 : vector<8x32xf32>
    %373 = arith.mulf %369, %368 : vector<8x32xf32>
    %374 = arith.addf %372, %373 : vector<8x32xf32>
    %375 = math.tanh %374 : vector<8x32xf32>
    %376 = arith.mulf %371, %375 : vector<8x32xf32>
    %c0_111 = arith.constant 0 : index
    %c0_112 = arith.constant 0 : index
    %377 = vector.load %arg2[%c0_111, %c0_112] : memref<33x4xf32, #tpu.memory_space<vmem>>, vector<32x4xf32>
    %378 = arith.truncf %377 : vector<32x4xf32> to vector<32x4xbf16>
    %c32_113 = arith.constant 32 : index
    %c0_114 = arith.constant 0 : index
    %379 = vector.load %arg2[%c32_113, %c0_114] : memref<33x4xf32, #tpu.memory_space<vmem>>, vector<1x4xf32>
    %380 = arith.truncf %376 : vector<8x32xf32> to vector<8x32xbf16>
    %cst_115 = arith.constant dense<0.000000e+00> : vector<8x4xf32>
    %381 = tpu.matmul %380, %378, %cst_115 {dimension_numbers = #tpu.dot_dimension_numbers<[1], [0], [0], [1], [0, 0, 1, 1], [], []>} : vector<8x32xbf16>, vector<32x4xbf16>, vector<8x4xf32> -> vector<8x4xf32>
    %382 = vector.broadcast %379 : vector<1x4xf32> to vector<8x4xf32>
    %383 = arith.addf %381, %382 : vector<8x4xf32>
    %384 = vector.extract_strided_slice %383 {offsets = [0, 0], sizes = [2, 4], strides = [1, 1]} : vector<8x4xf32> to vector<2x4xf32>
    %c0_116 = arith.constant 0 : index
    %c0_117 = arith.constant 0 : index
    %385 = vector.load %arg3[%c0_116, %c0_117] : memref<2x4xf32, #tpu.memory_space<vmem>>, vector<2x4xf32>
    tpu.vector_store %arg3[%c0_116, %c0_117], %384 {strides = array<i32>} : memref<2x4xf32, #tpu.memory_space<vmem>>, vector<2x4xf32>,
    return
  }
}

</mosaic_0001>

<llo_original>
// kernel: task_config_network_forward.1
$region0: #{task_config_network_forward.1}
  #allocation0 [shape = 'u32[]', space=smem, size = 0x4, offset = 0x4, fixed_abs, tag = 'smem constant byte address 0x4 - core index']
  #allocation1 [shape = 'u32[144,128]{1,0:T(1,128)}', space=vmem, size = 0x12000, scoped, tag = 'internal scratch']
  #allocation2 [shape = 'f32[64,32]{1,0:T(8,128)}', space=vmem, size = 0x8000, scoped, tag = 'scratch operand']
  #allocation3 [shape = 'f32[64,128]{1,0:T(8,128)}', space=vmem, size = 0x8000, scoped, tag = 'scratch operand']
  %s0 = inlined_call_operand.vmem [shape: f32[2,32], index: 0, kind: input, shape index: {}]
  %s1 = inlined_call_operand.vmem [shape: f32[2,65,128], index: 1, kind: input, shape index: {}]
  %s2 = inlined_call_operand.vmem [shape: f32[33,4], index: 2, kind: input, shape index: {}]
  %s3 = inlined_call_operand.hbm [shape: f32[2,4], index: 3, kind: output, shape index: {}]
  %s4 = sld [smem:[#allocation0]]
  $region22: #{task_config_network_forward.1} parent=0
    _
  %s6 = ssub.s32 1, %s4
  %s7 = scalar_select 0, %s6, %s4
  $region1: #{task_config_network_forward.1} parent=0
    #allocation4 [shape = 'u8[1024]{0}', space=vmem, size = 0x400, scoped, tag = 'output window, operand 0, single buffered']
    #allocation5 [shape = 's32[1]{0}', space=sflag, size = 0x4, scoped, tag = 'scoped memory for task_config_network_forward.1']
    %8 = vsyncpa [#allocation5], 0
    // Predicated region
    $region2: #{task_config_network_forward.1} parent=1 // pred_check
      _
    $region3: #{task_config_network_forward.1} parent=1 // pred_check_branch
      %10 = sbr.rel (0) target = $region5
    $region4: #{task_config_network_forward.1} parent=1 // pred_region
      _
    $region5: #{task_config_network_forward.1} parent=1 // pred_fallthru
      _
    // Predicated region
    $region6: #{task_config_network_forward.1} parent=1 // pred_check
      _
    $region7: #{task_config_network_forward.1} parent=1 // pred_check_branch
      %12 = sbr.rel (0) target = $region9
    $region8: #{task_config_network_forward.1} parent=1 // pred_region
      _
    $region9: #{task_config_network_forward.1} parent=1 // pred_fallthru
      _
    // Predicated region
    $region10: #{task_config_network_forward.1} parent=1 // pred_check
      _
    $region11: #{task_config_network_forward.1} parent=1 // pred_check_branch
      %14 = sbr.rel (0) target = $region13
    $region12: #{task_config_network_forward.1} parent=1 // pred_region
      _
    $region13: #{task_config_network_forward.1} parent=1 // pred_fallthru
      _
    %vm16 = vcmask 261120
    %17 = vst.msk [vmem:[#allocation2] sm:$0xff] %vm16, 0.0
    %18 = vst.msk [vmem:[#allocation2 + $0x8] sm:$0xff] %vm16, 0.0
    %19 = vst.msk [vmem:[#allocation2 + $0x10] sm:$0xff] %vm16, 0.0
    %20 = vst.msk [vmem:[#allocation2 + $0x18] sm:$0xff] %vm16, 0.0
    %21 = vst.msk [vmem:[#allocation2 + $0x20] sm:$0xff] %vm16, 0.0
    %22 = vst.msk [vmem:[#allocation2 + $0x28] sm:$0xff] %vm16, 0.0
    %23 = vst.msk [vmem:[#allocation2 + $0x30] sm:$0xff] %vm16, 0.0
    %24 = vst.msk [vmem:[#allocation2 + $0x38] sm:$0xff] %vm16, 0.0
    %v25 = vld [vmem:[%s0] sm:$0x3]
    %vm26 = vcmask 25600
    %27 = vst.msk [vmem:[#allocation2] sm:$0x3] %vm26, %v25
    %29 = vrot.lane.b32.xlu0 %v25, 124
    %v30 = vpop.permute.xlu0 %29
    %32 = vst.msk [vmem:[#allocation2 + $0x8] sm:$0x3] %vm26, %v30
    %33 = vrot.lane.b32.xlu0 %v25, 120
    %v34 = vpop.permute.xlu0 %33
    %36 = vst.msk [vmem:[#allocation2 + $0x10] sm:$0x3] %vm26, %v34
    %37 = vrot.lane.b32.xlu0 %v25, 116
    %v38 = vpop.permute.xlu0 %37
    %40 = vst.msk [vmem:[#allocation2 + $0x18] sm:$0x3] %vm26, %v38
    %41 = vrot.lane.b32.xlu0 %v25, 112
    %v42 = vpop.permute.xlu0 %41
    %44 = vst.msk [vmem:[#allocation2 + $0x20] sm:$0x3] %vm26, %v42
    %45 = vrot.lane.b32.xlu0 %v25, 108
    %v46 = vpop.permute.xlu0 %45
    %48 = vst.msk [vmem:[#allocation2 + $0x28] sm:$0x3] %vm26, %v46
    %49 = vrot.lane.b32.xlu0 %v25, 104
    %v50 = vpop.permute.xlu0 %49
    %52 = vst.msk [vmem:[#allocation2 + $0x30] sm:$0x3] %vm26, %v50
    %53 = vrot.lane.b32.xlu0 %v25, 100
    %v54 = vpop.permute.xlu0 %53
    %56 = vst.msk [vmem:[#allocation2 + $0x38] sm:$0x3] %vm26, %v54
    %v57 = vld [vmem:[%s1] sm:$0xff]
    %v58 = vld [vmem:[%s1 + $0x8] sm:$0xff]
    %v59 = vld [vmem:[%s1 + $0x10] sm:$0xff]
    %v60 = vld [vmem:[%s1 + $0x18] sm:$0xff]
    %v61 = vld [vmem:[%s1 + $0x20] sm:$0xff]
    %v62 = vld [vmem:[%s1 + $0x28] sm:$0xff]
    %v63 = vld [vmem:[%s1 + $0x30] sm:$0xff]
    %v64 = vld [vmem:[%s1 + $0x38] sm:$0xff]
    %v65 = vld [vmem:[%s1 + $0x40] sm:$0x1]
    %v66 = vpack.c.bf16 %v58, %v57
    %v67 = vpack.c.bf16 %v60, %v59
    %v68 = vpack.c.bf16 %v62, %v61
    %v69 = vpack.c.bf16 %v64, %v63
    %v70 = vld [vmem:[#allocation2] sm:$0xff]
    %v71 = vld [vmem:[#allocation2 + $0x8] sm:$0xff]
    %v72 = vld [vmem:[#allocation2 + $0x10] sm:$0xff]
    %v73 = vld [vmem:[#allocation2 + $0x18] sm:$0xff]
    %v74 = vld [vmem:[#allocation2 + $0x20] sm:$0xff]
    %v75 = vld [vmem:[#allocation2 + $0x28] sm:$0xff]
    %v76 = vld [vmem:[#allocation2 + $0x30] sm:$0xff]
    %v77 = vld [vmem:[#allocation2 + $0x38] sm:$0xff]
    %v78 = vpack.c.bf16 %v71, %v70
    %v79 = vpack.c.bf16 %v73, %v72
    %v80 = vpack.c.bf16 %v75, %v74
    %v81 = vpack.c.bf16 %v77, %v76
    %v82 = vlaneseq
    %v83 = vshrl.u32 %v82, 7
    %v84 = vsub.s32 0, %v83
    %v85 = vrot.slane %v65, %v84
    %v87 = vsel %vm16, %v78, 0
    %v90 = vsel %vm16, %v79, 0
    %v93 = vsel %vm16, %v80, 0
    %v96 = vsel %vm16, %v81, 0
    %98 = vmatprep.subr.bf16.mxu0 0
    %99 = vmatpush1.bf16.msra.mxu0 %v66
    %100 = vmatprep.subr.bf16.mxu0 0
    %101 = vmatpush1.bf16.msra.mxu0 %v67
    %102 = vmatprep.subr.bf16.mxu0 0
    %103 = vmatpush1.bf16.msra.mxu0 0
    %104 = vmatprep.subr.bf16.mxu0 0
    %105 = vmatpush1.bf16.msra.mxu0 0
    %106 = vmatprep.subr.bf16.mxu0 0
    %107 = vmatpush1.bf16.msra.mxu0 0
    %108 = vmatprep.subr.bf16.mxu0 0
    %109 = vmatpush1.bf16.msra.mxu0 0
    %110 = vmatprep.subr.bf16.mxu0 0
    %111 = vmatpush1.bf16.msra.mxu0 0
    %112 = vmatprep.subr.bf16.mxu0 0
    %113 = vmatpush1.bf16.msra.mxu0 0
    %114 = vmatprep.subr.bf16.mxu0 0
    %115 = vmatpush1.bf16.msra.mxu0 0
    %116 = vmatprep.subr.bf16.mxu0 0
    %117 = vmatpush1.bf16.msra.mxu0 0
    %118 = vmatprep.subr.bf16.mxu0 0
    %119 = vmatpush1.bf16.msra.mxu0 0
    %120 = vmatprep.subr.bf16.mxu0 0
    %121 = vmatpush1.bf16.msra.mxu0 0
    %122 = vmatprep.subr.bf16.mxu0 0
    %123 = vmatpush1.bf16.msra.mxu0 0
    %124 = vmatprep.subr.bf16.mxu0 0
    %125 = vmatpush1.bf16.msra.mxu0 0
    %126 = vmatprep.subr.bf16.mxu0 0
    %127 = vmatpush1.bf16.msra.mxu0 0
    %128 = vmatprep.subr.bf16.mxu0 0
    %129 = vmatpush1.bf16.msra.mxu0 0
    %130 = vmatprep.mubr.bf16.mxu0 0
    %131 = vmatmul.mubr.bf16.gmra.mrb[0].mxu0 %v87
    %v132 = vpop.f32.mrb[0].mxu0
    %v133 = vadd.f32 %v85, %v132
    %v134 = vpop.f32.mrb[0].mxu0
    %v135 = vpop.f32.mrb[0].mxu0
    %v136 = vadd.f32 %v85, %v135
    %v137 = vpop.f32.mrb[0].mxu0
    %138 = vmatprep.mubr.bf16.mxu0 0
    %139 = vmatmul.mubr.bf16.gmra.mrb[0].mxu0 %v90
    %v140 = vpop.f32.mrb[0].mxu0
    %v141 = vadd.f32 %v85, %v140
    %v142 = vpop.f32.mrb[0].mxu0
    %v143 = vpop.f32.mrb[0].mxu0
    %v144 = vadd.f32 %v85, %v143
    %v145 = vpop.f32.mrb[0].mxu0
    %146 = vmatprep.mubr.bf16.mxu0 0
    %147 = vmatmul.mubr.bf16.gmra.mrb[0].mxu0 %v93
    %v148 = vpop.f32.mrb[0].mxu0
    %v149 = vadd.f32 %v85, %v148
    %v150 = vpop.f32.mrb[0].mxu0
    %v151 = vpop.f32.mrb[0].mxu0
    %v152 = vadd.f32 %v85, %v151
    %v153 = vpop.f32.mrb[0].mxu0
    %154 = vmatprep.mubr.bf16.mxu0 0
    %155 = vmatmul.mubr.bf16.gmra.mrb[0].mxu0 %v96
    %v156 = vpop.f32.mrb[0].mxu0
    %v157 = vadd.f32 %v85, %v156
    %v158 = vpop.f32.mrb[0].mxu0
    %v159 = vpop.f32.mrb[0].mxu0
    %v160 = vadd.f32 %v85, %v159
    %v161 = vpop.f32.mrb[0].mxu0
    %162 = vdwg.mxu0
    %163 = vst [vmem:[#allocation3] sm:$0xff] %v133
    %164 = vst [vmem:[#allocation3 + $0x8] sm:$0xff] %v136
    %165 = vst [vmem:[#allocation3 + $0x10] sm:$0xff] %v141
    %166 = vst [vmem:[#allocation3 + $0x18] sm:$0xff] %v144
    %167 = vst [vmem:[#allocation3 + $0x20] sm:$0xff] %v149
    %168 = vst [vmem:[#allocation3 + $0x28] sm:$0xff] %v152
    %169 = vst [vmem:[#allocation3 + $0x30] sm:$0xff] %v157
    %170 = vst [vmem:[#allocation3 + $0x38] sm:$0xff] %v160
    %v171 = vld [vmem:[#allocation3] sm:$0xff]
    %v173 = vsel %vm16, 0, 0
    %175 = vmatprep.subr.bf16.mxu0 0
    %176 = vmatpush1.bf16.msra.mxu0 %v68
    %177 = vmatprep.subr.bf16.mxu0 0
    %178 = vmatpush1.bf16.msra.mxu0 %v69
    %179 = vmatprep.subr.bf16.mxu0 0
    %180 = vmatpush1.bf16.msra.mxu0 0
    %181 = vmatprep.subr.bf16.mxu0 0
    %182 = vmatpush1.bf16.msra.mxu0 0
    %183 = vmatprep.subr.bf16.mxu0 0
    %184 = vmatpush1.bf16.msra.mxu0 0
    %185 = vmatprep.subr.bf16.mxu0 0
    %186 = vmatpush1.bf16.msra.mxu0 0
    %187 = vmatprep.subr.bf16.mxu0 0
    %188 = vmatpush1.bf16.msra.mxu0 0
    %189 = vmatprep.subr.bf16.mxu0 0
    %190 = vmatpush1.bf16.msra.mxu0 0
    %191 = vmatprep.subr.bf16.mxu0 0
    %192 = vmatpush1.bf16.msra.mxu0 0
    %193 = vmatprep.subr.bf16.mxu0 0
    %194 = vmatpush1.bf16.msra.mxu0 0
    %195 = vmatprep.subr.bf16.mxu0 0
    %196 = vmatpush1.bf16.msra.mxu0 0
    %197 = vmatprep.subr.bf16.mxu0 0
    %198 = vmatpush1.bf16.msra.mxu0 0
    %199 = vmatprep.subr.bf16.mxu0 0
    %200 = vmatpush1.bf16.msra.mxu0 0
    %201 = vmatprep.subr.bf16.mxu0 0
    %202 = vmatpush1.bf16.msra.mxu0 0
    %203 = vmatprep.subr.bf16.mxu0 0
    %204 = vmatpush1.bf16.msra.mxu0 0
    %205 = vmatprep.subr.bf16.mxu0 0
    %206 = vmatpush1.bf16.msra.mxu0 0
    %207 = vmatprep.mubr.bf16.mxu0 0
    %208 = vmatmul.mubr.bf16.gmra.mrb[0].mxu0 %v173
    %v209 = vpop.f32.mrb[0].mxu0
    %v210 = vadd.f32 0.0, %v209
    %v211 = vpop.f32.mrb[0].mxu0
    %v212 = vpop.f32.mrb[0].mxu0
    %v213 = vpop.f32.mrb[0].mxu0
    %214 = vdwg.mxu0
    %v215 = vadd.f32 %v171, %v210
    %v216 = vxor.u32 %v215, 2147483648
    %v217 = vmul.f32 %v216, 1.442695
    %v218 = vpow.pop %v217
    %v219 = vadd.f32 %v218, 1.0
    %v220 = vrcp.pop %v219
    %v221 = vmul.f32 1.0, %v220
    %v222 = vtanh.pop %v215
    %v223 = vmul.f32 %v221, 0.0
    %225 = vrot.lane.b32.xlu0 %v222, 32
    %v226 = vpop.permute.xlu0 %225
    %v228 = vmul.f32 %v221, %v226
    %230 = vrot.lane.b32.xlu0 %v228, 32
    %v231 = vpop.permute.xlu0 %230
    %v233 = vadd.f32 %v223, %v231
    %v234 = vtanh.pop %v233
    %236 = vrot.lane.b32.xlu0 %v234, 32
    %v237 = vpop.permute.xlu0 %236
    %v239 = vmul.f32 %v221, %v237
    %241 = vrot.lane.b32.xlu0 %v239, 64
    %v242 = vpop.permute.xlu0 %241
    %244 = vst.msk [vmem:[#allocation2] sm:$0xff] %vm16, %v242
    %v245 = vld [vmem:[#allocation3 + $0x8] sm:$0xff]
    %v246 = vpack.c.bf16 %v239, %v239
    %248 = vrot.lane.b32.xlu0 %v246, 64
    %v249 = vpop.permute.xlu0 %248
    %v251 = vsel %vm16, %v249, 0
    %253 = vmatprep.subr.bf16.mxu0 0
    %254 = vmatpush1.bf16.msra.mxu0 %v68
    %255 = vmatprep.subr.bf16.mxu0 0
    %256 = vmatpush1.bf16.msra.mxu0 %v69
    %257 = vmatprep.subr.bf16.mxu0 0
    %258 = vmatpush1.bf16.msra.mxu0 0
    %259 = vmatprep.subr.bf16.mxu0 0
    %260 = vmatpush1.bf16.msra.mxu0 0
    %261 = vmatprep.subr.bf16.mxu0 0
    %262 = vmatpush1.bf16.msra.mxu0 0
    %263 = vmatprep.subr.bf16.mxu0 0
    %264 = vmatpush1.bf16.msra.mxu0 0
    %265 = vmatprep.subr.bf16.mxu0 0
    %266 = vmatpush1.bf16.msra.mxu0 0
    %267 = vmatprep.subr.bf16.mxu0 0
    %268 = vmatpush1.bf16.msra.mxu0 0
    %269 = vmatprep.subr.bf16.mxu0 0
    %270 = vmatpush1.bf16.msra.mxu0 0
    %271 = vmatprep.subr.bf16.mxu0 0
    %272 = vmatpush1.bf16.msra.mxu0 0
    %273 = vmatprep.subr.bf16.mxu0 0
    %274 = vmatpush1.bf16.msra.mxu0 0
    %275 = vmatprep.subr.bf16.mxu0 0
    %276 = vmatpush1.bf16.msra.mxu0 0
    %277 = vmatprep.subr.bf16.mxu0 0
    %278 = vmatpush1.bf16.msra.mxu0 0
    %279 = vmatprep.subr.bf16.mxu0 0
    %280 = vmatpush1.bf16.msra.mxu0 0
    %281 = vmatprep.subr.bf16.mxu0 0
    %282 = vmatpush1.bf16.msra.mxu0 0
    %283 = vmatprep.subr.bf16.mxu0 0
    %284 = vmatpush1.bf16.msra.mxu0 0
    %285 = vmatprep.mubr.bf16.mxu0 0
    %286 = vmatmul.mubr.bf16.gmra.mrb[0].mxu0 %v251
    %v287 = vpop.f32.mrb[0].mxu0
    %v288 = vadd.f32 0.0, %v287
    %v289 = vpop.f32.mrb[0].mxu0
    %v290 = vpop.f32.mrb[0].mxu0
    %v291 = vpop.f32.mrb[0].mxu0
    %292 = vdwg.mxu0
    %v293 = vadd.f32 %v245, %v288
    %v294 = vxor.u32 %v293, 2147483648
    %v295 = vmul.f32 %v294, 1.442695
    %v296 = vpow.pop %v295
    %v297 = vadd.f32 %v296, 1.0
    %v298 = vrcp.pop %v297
    %v299 = vmul.f32 1.0, %v298
    %v300 = vtanh.pop %v293
    %v301 = vmul.f32 %v299, %v233
    %303 = vrot.lane.b32.xlu0 %v300, 32
    %v304 = vpop.permute.xlu0 %303
    %v306 = vmul.f32 %v299, %v304
    %308 = vrot.lane.b32.xlu0 %v306, 32
    %v309 = vpop.permute.xlu0 %308
    %v311 = vadd.f32 %v301, %v309
    %v312 = vtanh.pop %v311
    %314 = vrot.lane.b32.xlu0 %v312, 32
    %v315 = vpop.permute.xlu0 %314
    %v317 = vmul.f32 %v299, %v315
    %319 = vrot.lane.b32.xlu0 %v317, 64
    %v320 = vpop.permute.xlu0 %319
    %322 = vst.msk [vmem:[#allocation2 + $0x8] sm:$0xff] %vm16, %v320
    %v323 = vld [vmem:[#allocation3 + $0x10] sm:$0xff]
    %v324 = vpack.c.bf16 %v317, %v317
    %326 = vrot.lane.b32.xlu0 %v324, 64
    %v327 = vpop.permute.xlu0 %326
    %v329 = vsel %vm16, %v327, 0
    %331 = vmatprep.subr.bf16.mxu0 0
    %332 = vmatpush1.bf16.msra.mxu0 %v68
    %333 = vmatprep.subr.bf16.mxu0 0
    %334 = vmatpush1.bf16.msra.mxu0 %v69
    %335 = vmatprep.subr.bf16.mxu0 0
    %336 = vmatpush1.bf16.msra.mxu0 0
    %337 = vmatprep.subr.bf16.mxu0 0
    %338 = vmatpush1.bf16.msra.mxu0 0
    %339 = vmatprep.subr.bf16.mxu0 0
    %340 = vmatpush1.bf16.msra.mxu0 0
    %341 = vmatprep.subr.bf16.mxu0 0
    %342 = vmatpush1.bf16.msra.mxu0 0
    %343 = vmatprep.subr.bf16.mxu0 0
    %344 = vmatpush1.bf16.msra.mxu0 0
    %345 = vmatprep.subr.bf16.mxu0 0
    %346 = vmatpush1.bf16.msra.mxu0 0
    %347 = vmatprep.subr.bf16.mxu0 0
    %348 = vmatpush1.bf16.msra.mxu0 0
    %349 = vmatprep.subr.bf16.mxu0 0
    %350 = vmatpush1.bf16.msra.mxu0 0
    %351 = vmatprep.subr.bf16.mxu0 0
    %352 = vmatpush1.bf16.msra.mxu0 0
    %353 = vmatprep.subr.bf16.mxu0 0
    %354 = vmatpush1.bf16.msra.mxu0 0
    %355 = vmatprep.subr.bf16.mxu0 0
    %356 = vmatpush1.bf16.msra.mxu0 0
    %357 = vmatprep.subr.bf16.mxu0 0
    %358 = vmatpush1.bf16.msra.mxu0 0
    %359 = vmatprep.subr.bf16.mxu0 0
    %360 = vmatpush1.bf16.msra.mxu0 0
    %361 = vmatprep.subr.bf16.mxu0 0
    %362 = vmatpush1.bf16.msra.mxu0 0
    %363 = vmatprep.mubr.bf16.mxu0 0
    %364 = vmatmul.mubr.bf16.gmra.mrb[0].mxu0 %v329
    %v365 = vpop.f32.mrb[0].mxu0
    %v366 = vadd.f32 0.0, %v365
    %v367 = vpop.f32.mrb[0].mxu0
    %v368 = vpop.f32.mrb[0].mxu0
    %v369 = vpop.f32.mrb[0].mxu0
    %370 = vdwg.mxu0
    %v371 = vadd.f32 %v323, %v366
    %v372 = vxor.u32 %v371, 2147483648
    %v373 = vmul.f32 %v372, 1.442695
    %v374 = vpow.pop %v373
    %v375 = vadd.f32 %v374, 1.0
    %v376 = vrcp.pop %v375
    %v377 = vmul.f32 1.0, %v376
    %v378 = vtanh.pop %v371
    %v379 = vmul.f32 %v377, %v311
    %381 = vrot.lane.b32.xlu0 %v378, 32
    %v382 = vpop.permute.xlu0 %381
    %v384 = vmul.f32 %v377, %v382
    %386 = vrot.lane.b32.xlu0 %v384, 32
    %v387 = vpop.permute.xlu0 %386
    %v389 = vadd.f32 %v379, %v387
    %v390 = vtanh.pop %v389
    %392 = vrot.lane.b32.xlu0 %v390, 32
    %v393 = vpop.permute.xlu0 %392
    %v395 = vmul.f32 %v377, %v393
    %397 = vrot.lane.b32.xlu0 %v395, 64
    %v398 = vpop.permute.xlu0 %397
    %400 = vst.msk [vmem:[#allocation2 + $0x10] sm:$0xff] %vm16, %v398
    %v401 = vld [vmem:[#allocation3 + $0x18] sm:$0xff]
    %v402 = vpack.c.bf16 %v395, %v395
    %404 = vrot.lane.b32.xlu0 %v402, 64
    %v405 = vpop.permute.xlu0 %404
    %v407 = vsel %vm16, %v405, 0
    %409 = vmatprep.subr.bf16.mxu0 0
    %410 = vmatpush1.bf16.msra.mxu0 %v68
    %411 = vmatprep.subr.bf16.mxu0 0
    %412 = vmatpush1.bf16.msra.mxu0 %v69
    %413 = vmatprep.subr.bf16.mxu0 0
    %414 = vmatpush1.bf16.msra.mxu0 0
    %415 = vmatprep.subr.bf16.mxu0 0
    %416 = vmatpush1.bf16.msra.mxu0 0
    %417 = vmatprep.subr.bf16.mxu0 0
    %418 = vmatpush1.bf16.msra.mxu0 0
    %419 = vmatprep.subr.bf16.mxu0 0
    %420 = vmatpush1.bf16.msra.mxu0 0
    %421 = vmatprep.subr.bf16.mxu0 0
    %422 = vmatpush1.bf16.msra.mxu0 0
    %423 = vmatprep.subr.bf16.mxu0 0
    %424 = vmatpush1.bf16.msra.mxu0 0
    %425 = vmatprep.subr.bf16.mxu0 0
    %426 = vmatpush1.bf16.msra.mxu0 0
    %427 = vmatprep.subr.bf16.mxu0 0
    %428 = vmatpush1.bf16.msra.mxu0 0
    %429 = vmatprep.subr.bf16.mxu0 0
    %430 = vmatpush1.bf16.msra.mxu0 0
    %431 = vmatprep.subr.bf16.mxu0 0
    %432 = vmatpush1.bf16.msra.mxu0 0
    %433 = vmatprep.subr.bf16.mxu0 0
    %434 = vmatpush1.bf16.msra.mxu0 0
    %435 = vmatprep.subr.bf16.mxu0 0
    %436 = vmatpush1.bf16.msra.mxu0 0
    %437 = vmatprep.subr.bf16.mxu0 0
    %438 = vmatpush1.bf16.msra.mxu0 0
    %439 = vmatprep.subr.bf16.mxu0 0
    %440 = vmatpush1.bf16.msra.mxu0 0
    %441 = vmatprep.mubr.bf16.mxu0 0
    %442 = vmatmul.mubr.bf16.gmra.mrb[0].mxu0 %v407
    %v443 = vpop.f32.mrb[0].mxu0
    %v444 = vadd.f32 0.0, %v443
    %v445 = vpop.f32.mrb[0].mxu0
    %v446 = vpop.f32.mrb[0].mxu0
    %v447 = vpop.f32.mrb[0].mxu0
    %448 = vdwg.mxu0
    %v449 = vadd.f32 %v401, %v444
    %v450 = vxor.u32 %v449, 2147483648
    %v451 = vmul.f32 %v450, 1.442695
    %v452 = vpow.pop %v451
    %v453 = vadd.f32 %v452, 1.0
    %v454 = vrcp.pop %v453
    %v455 = vmul.f32 1.0, %v454
    %v456 = vtanh.pop %v449
    %v457 = vmul.f32 %v455, %v389
    %459 = vrot.lane.b32.xlu0 %v456, 32
    %v460 = vpop.permute.xlu0 %459
    %v462 = vmul.f32 %v455, %v460
    %464 = vrot.lane.b32.xlu0 %v462, 32
    %v465 = vpop.permute.xlu0 %464
    %v467 = vadd.f32 %v457, %v465
    %v468 = vtanh.pop %v467
    %470 = vrot.lane.b32.xlu0 %v468, 32
    %v471 = vpop.permute.xlu0 %470
    %v473 = vmul.f32 %v455, %v471
    %475 = vrot.lane.b32.xlu0 %v473, 64
    %v476 = vpop.permute.xlu0 %475
    %478 = vst.msk [vmem:[#allocation2 + $0x18] sm:$0xff] %vm16, %v476
    %v479 = vld [vmem:[#allocation3 + $0x20] sm:$0xff]
    %v480 = vpack.c.bf16 %v473, %v473
    %482 = vrot.lane.b32.xlu0 %v480, 64
    %v483 = vpop.permute.xlu0 %482
    %v485 = vsel %vm16, %v483, 0
    %487 = vmatprep.subr.bf16.mxu0 0
    %488 = vmatpush1.bf16.msra.mxu0 %v68
    %489 = vmatprep.subr.bf16.mxu0 0
    %490 = vmatpush1.bf16.msra.mxu0 %v69
    %491 = vmatprep.subr.bf16.mxu0 0
    %492 = vmatpush1.bf16.msra.mxu0 0
    %493 = vmatprep.subr.bf16.mxu0 0
    %494 = vmatpush1.bf16.msra.mxu0 0
    %495 = vmatprep.subr.bf16.mxu0 0
    %496 = vmatpush1.bf16.msra.mxu0 0
    %497 = vmatprep.subr.bf16.mxu0 0
    %498 = vmatpush1.bf16.msra.mxu0 0
    %499 = vmatprep.subr.bf16.mxu0 0
    %500 = vmatpush1.bf16.msra.mxu0 0
    %501 = vmatprep.subr.bf16.mxu0 0
    %502 = vmatpush1.bf16.msra.mxu0 0
    %503 = vmatprep.subr.bf16.mxu0 0
    %504 = vmatpush1.bf16.msra.mxu0 0
    %505 = vmatprep.subr.bf16.mxu0 0
    %506 = vmatpush1.bf16.msra.mxu0 0
    %507 = vmatprep.subr.bf16.mxu0 0
    %508 = vmatpush1.bf16.msra.mxu0 0
    %509 = vmatprep.subr.bf16.mxu0 0
    %510 = vmatpush1.bf16.msra.mxu0 0
    %511 = vmatprep.subr.bf16.mxu0 0
    %512 = vmatpush1.bf16.msra.mxu0 0
    %513 = vmatprep.subr.bf16.mxu0 0
    %514 = vmatpush1.bf16.msra.mxu0 0
    %515 = vmatprep.subr.bf16.mxu0 0
    %516 = vmatpush1.bf16.msra.mxu0 0
    %517 = vmatprep.subr.bf16.mxu0 0
    %518 = vmatpush1.bf16.msra.mxu0 0
    %519 = vmatprep.mubr.bf16.mxu0 0
    %520 = vmatmul.mubr.bf16.gmra.mrb[0].mxu0 %v485
    %v521 = vpop.f32.mrb[0].mxu0
    %v522 = vadd.f32 0.0, %v521
    %v523 = vpop.f32.mrb[0].mxu0
    %v524 = vpop.f32.mrb[0].mxu0
    %v525 = vpop.f32.mrb[0].mxu0
    %526 = vdwg.mxu0
    %v527 = vadd.f32 %v479, %v522
    %v528 = vxor.u32 %v527, 2147483648
    %v529 = vmul.f32 %v528, 1.442695
    %v530 = vpow.pop %v529
    %v531 = vadd.f32 %v530, 1.0
    %v532 = vrcp.pop %v531
    %v533 = vmul.f32 1.0, %v532
    %v534 = vtanh.pop %v527
    %v535 = vmul.f32 %v533, %v467
    %537 = vrot.lane.b32.xlu0 %v534, 32
    %v538 = vpop.permute.xlu0 %537
    %v540 = vmul.f32 %v533, %v538
    %542 = vrot.lane.b32.xlu0 %v540, 32
    %v543 = vpop.permute.xlu0 %542
    %v545 = vadd.f32 %v535, %v543
    %v546 = vtanh.pop %v545
    %548 = vrot.lane.b32.xlu0 %v546, 32
    %v549 = vpop.permute.xlu0 %548
    %v551 = vmul.f32 %v533, %v549
    %553 = vrot.lane.b32.xlu0 %v551, 64
    %v554 = vpop.permute.xlu0 %553
    %556 = vst.msk [vmem:[#allocation2 + $0x20] sm:$0xff] %vm16, %v554
    %v557 = vld [vmem:[#allocation3 + $0x28] sm:$0xff]
    %v558 = vpack.c.bf16 %v551, %v551
    %560 = vrot.lane.b32.xlu0 %v558, 64
    %v561 = vpop.permute.xlu0 %560
    %v563 = vsel %vm16, %v561, 0
    %565 = vmatprep.subr.bf16.mxu0 0
    %566 = vmatpush1.bf16.msra.mxu0 %v68
    %567 = vmatprep.subr.bf16.mxu0 0
    %568 = vmatpush1.bf16.msra.mxu0 %v69
    %569 = vmatprep.subr.bf16.mxu0 0
    %570 = vmatpush1.bf16.msra.mxu0 0
    %571 = vmatprep.subr.bf16.mxu0 0
    %572 = vmatpush1.bf16.msra.mxu0 0
    %573 = vmatprep.subr.bf16.mxu0 0
    %574 = vmatpush1.bf16.msra.mxu0 0
    %575 = vmatprep.subr.bf16.mxu0 0
    %576 = vmatpush1.bf16.msra.mxu0 0
    %577 = vmatprep.subr.bf16.mxu0 0
    %578 = vmatpush1.bf16.msra.mxu0 0
    %579 = vmatprep.subr.bf16.mxu0 0
    %580 = vmatpush1.bf16.msra.mxu0 0
    %581 = vmatprep.subr.bf16.mxu0 0
    %582 = vmatpush1.bf16.msra.mxu0 0
    %583 = vmatprep.subr.bf16.mxu0 0
    %584 = vmatpush1.bf16.msra.mxu0 0
    %585 = vmatprep.subr.bf16.mxu0 0
    %586 = vmatpush1.bf16.msra.mxu0 0
    %587 = vmatprep.subr.bf16.mxu0 0
    %588 = vmatpush1.bf16.msra.mxu0 0
    %589 = vmatprep.subr.bf16.mxu0 0
    %590 = vmatpush1.bf16.msra.mxu0 0
    %591 = vmatprep.subr.bf16.mxu0 0
    %592 = vmatpush1.bf16.msra.mxu0 0
    %593 = vmatprep.subr.bf16.mxu0 0
    %594 = vmatpush1.bf16.msra.mxu0 0
    %595 = vmatprep.subr.bf16.mxu0 0
    %596 = vmatpush1.bf16.msra.mxu0 0
    %597 = vmatprep.mubr.bf16.mxu0 0
    %598 = vmatmul.mubr.bf16.gmra.mrb[0].mxu0 %v563
    %v599 = vpop.f32.mrb[0].mxu0
    %v600 = vadd.f32 0.0, %v599
    %v601 = vpop.f32.mrb[0].mxu0
    %v602 = vpop.f32.mrb[0].mxu0
    %v603 = vpop.f32.mrb[0].mxu0
    %604 = vdwg.mxu0
    %v605 = vadd.f32 %v557, %v600
    %v606 = vxor.u32 %v605, 2147483648
    %v607 = vmul.f32 %v606, 1.442695
    %v608 = vpow.pop %v607
    %v609 = vadd.f32 %v608, 1.0
    %v610 = vrcp.pop %v609
    %v611 = vmul.f32 1.0, %v610
    %v612 = vtanh.pop %v605
    %v613 = vmul.f32 %v611, %v545
    %615 = vrot.lane.b32.xlu0 %v612, 32
    %v616 = vpop.permute.xlu0 %615
    %v618 = vmul.f32 %v611, %v616
    %620 = vrot.lane.b32.xlu0 %v618, 32
    %v621 = vpop.permute.xlu0 %620
    %v623 = vadd.f32 %v613, %v621
    %v624 = vtanh.pop %v623
    %626 = vrot.lane.b32.xlu0 %v624, 32
    %v627 = vpop.permute.xlu0 %626
    %v629 = vmul.f32 %v611, %v627
    %631 = vrot.lane.b32.xlu0 %v629, 64
    %v632 = vpop.permute.xlu0 %631
    %634 = vst.msk [vmem:[#allocation2 + $0x28] sm:$0xff] %vm16, %v632
    %v635 = vld [vmem:[#allocation3 + $0x30] sm:$0xff]
    %v636 = vpack.c.bf16 %v629, %v629
    %638 = vrot.lane.b32.xlu0 %v636, 64
    %v639 = vpop.permute.xlu0 %638
    %v641 = vsel %vm16, %v639, 0
    %643 = vmatprep.subr.bf16.mxu0 0
    %644 = vmatpush1.bf16.msra.mxu0 %v68
    %645 = vmatprep.subr.bf16.mxu0 0
    %646 = vmatpush1.bf16.msra.mxu0 %v69
    %647 = vmatprep.subr.bf16.mxu0 0
    %648 = vmatpush1.bf16.msra.mxu0 0
    %649 = vmatprep.subr.bf16.mxu0 0
    %650 = vmatpush1.bf16.msra.mxu0 0
    %651 = vmatprep.subr.bf16.mxu0 0
    %652 = vmatpush1.bf16.msra.mxu0 0
    %653 = vmatprep.subr.bf16.mxu0 0
    %654 = vmatpush1.bf16.msra.mxu0 0
    %655 = vmatprep.subr.bf16.mxu0 0
    %656 = vmatpush1.bf16.msra.mxu0 0
    %657 = vmatprep.subr.bf16.mxu0 0
    %658 = vmatpush1.bf16.msra.mxu0 0
    %659 = vmatprep.subr.bf16.mxu0 0
    %660 = vmatpush1.bf16.msra.mxu0 0
    %661 = vmatprep.subr.bf16.mxu0 0
    %662 = vmatpush1.bf16.msra.mxu0 0
    %663 = vmatprep.subr.bf16.mxu0 0
    %664 = vmatpush1.bf16.msra.mxu0 0
    %665 = vmatprep.subr.bf16.mxu0 0
    %666 = vmatpush1.bf16.msra.mxu0 0
    %667 = vmatprep.subr.bf16.mxu0 0
    %668 = vmatpush1.bf16.msra.mxu0 0
    %669 = vmatprep.subr.bf16.mxu0 0
    %670 = vmatpush1.bf16.msra.mxu0 0
    %671 = vmatprep.subr.bf16.mxu0 0
    %672 = vmatpush1.bf16.msra.mxu0 0
    %673 = vmatprep.subr.bf16.mxu0 0
    %674 = vmatpush1.bf16.msra.mxu0 0
    %675 = vmatprep.mubr.bf16.mxu0 0
    %676 = vmatmul.mubr.bf16.gmra.mrb[0].mxu0 %v641
    %v677 = vpop.f32.mrb[0].mxu0
    %v678 = vadd.f32 0.0, %v677
    %v679 = vpop.f32.mrb[0].mxu0
    %v680 = vpop.f32.mrb[0].mxu0
    %v681 = vpop.f32.mrb[0].mxu0
    %682 = vdwg.mxu0
    %v683 = vadd.f32 %v635, %v678
    %v684 = vxor.u32 %v683, 2147483648
    %v685 = vmul.f32 %v684, 1.442695
    %v686 = vpow.pop %v685
    %v687 = vadd.f32 %v686, 1.0
    %v688 = vrcp.pop %v687
    %v689 = vmul.f32 1.0, %v688
    %v690 = vtanh.pop %v683
    %v691 = vmul.f32 %v689, %v623
    %693 = vrot.lane.b32.xlu0 %v690, 32
    %v694 = vpop.permute.xlu0 %693
    %v696 = vmul.f32 %v689, %v694
    %698 = vrot.lane.b32.xlu0 %v696, 32
    %v699 = vpop.permute.xlu0 %698
    %v701 = vadd.f32 %v691, %v699
    %v702 = vtanh.pop %v701
    %704 = vrot.lane.b32.xlu0 %v702, 32
    %v705 = vpop.permute.xlu0 %704
    %v707 = vmul.f32 %v689, %v705
    %709 = vrot.lane.b32.xlu0 %v707, 64
    %v710 = vpop.permute.xlu0 %709
    %712 = vst.msk [vmem:[#allocation2 + $0x30] sm:$0xff] %vm16, %v710
    %v713 = vld [vmem:[#allocation3 + $0x38] sm:$0xff]
    %v714 = vpack.c.bf16 %v707, %v707
    %716 = vrot.lane.b32.xlu0 %v714, 64
    %v717 = vpop.permute.xlu0 %716
    %v719 = vsel %vm16, %v717, 0
    %721 = vmatprep.subr.bf16.mxu0 0
    %722 = vmatpush1.bf16.msra.mxu0 %v68
    %723 = vmatprep.subr.bf16.mxu0 0
    %724 = vmatpush1.bf16.msra.mxu0 %v69
    %725 = vmatprep.subr.bf16.mxu0 0
    %726 = vmatpush1.bf16.msra.mxu0 0
    %727 = vmatprep.subr.bf16.mxu0 0
    %728 = vmatpush1.bf16.msra.mxu0 0
    %729 = vmatprep.subr.bf16.mxu0 0
    %730 = vmatpush1.bf16.msra.mxu0 0
    %731 = vmatprep.subr.bf16.mxu0 0
    %732 = vmatpush1.bf16.msra.mxu0 0
    %733 = vmatprep.subr.bf16.mxu0 0
    %734 = vmatpush1.bf16.msra.mxu0 0
    %735 = vmatprep.subr.bf16.mxu0 0
    %736 = vmatpush1.bf16.msra.mxu0 0
    %737 = vmatprep.subr.bf16.mxu0 0
    %738 = vmatpush1.bf16.msra.mxu0 0
    %739 = vmatprep.subr.bf16.mxu0 0
    %740 = vmatpush1.bf16.msra.mxu0 0
    %741 = vmatprep.subr.bf16.mxu0 0
    %742 = vmatpush1.bf16.msra.mxu0 0
    %743 = vmatprep.subr.bf16.mxu0 0
    %744 = vmatpush1.bf16.msra.mxu0 0
    %745 = vmatprep.subr.bf16.mxu0 0
    %746 = vmatpush1.bf16.msra.mxu0 0
    %747 = vmatprep.subr.bf16.mxu0 0
    %748 = vmatpush1.bf16.msra.mxu0 0
    %749 = vmatprep.subr.bf16.mxu0 0
    %750 = vmatpush1.bf16.msra.mxu0 0
    %751 = vmatprep.subr.bf16.mxu0 0
    %752 = vmatpush1.bf16.msra.mxu0 0
    %753 = vmatprep.mubr.bf16.mxu0 0
    %754 = vmatmul.mubr.bf16.gmra.mrb[0].mxu0 %v719
    %v755 = vpop.f32.mrb[0].mxu0
    %v756 = vadd.f32 0.0, %v755
    %v757 = vpop.f32.mrb[0].mxu0
    %v758 = vpop.f32.mrb[0].mxu0
    %v759 = vpop.f32.mrb[0].mxu0
    %760 = vdwg.mxu0
    %v761 = vadd.f32 %v713, %v756
    %v762 = vxor.u32 %v761, 2147483648
    %v763 = vmul.f32 %v762, 1.442695
    %v764 = vpow.pop %v763
    %v765 = vadd.f32 %v764, 1.0
    %v766 = vrcp.pop %v765
    %v767 = vmul.f32 1.0, %v766
    %v768 = vtanh.pop %v761
    %v769 = vmul.f32 %v767, %v701
    %771 = vrot.lane.b32.xlu0 %v768, 32
    %v772 = vpop.permute.xlu0 %771
    %v774 = vmul.f32 %v767, %v772
    %776 = vrot.lane.b32.xlu0 %v774, 32
    %v777 = vpop.permute.xlu0 %776
    %v779 = vadd.f32 %v769, %v777
    %v780 = vtanh.pop %v779
    %782 = vrot.lane.b32.xlu0 %v780, 32
    %v783 = vpop.permute.xlu0 %782
    %v785 = vmul.f32 %v767, %v783
    %787 = vrot.lane.b32.xlu0 %v785, 64
    %v788 = vpop.permute.xlu0 %787
    %790 = vst.msk [vmem:[#allocation2 + $0x38] sm:$0xff] %vm16, %v788
    %s791 = scalar_lea.vmem %s1, 72
    %v792 = vld [vmem:[%s791] sm:$0xff]
    %v793 = vld [vmem:[%s791 + $0x8] sm:$0xff]
    %v794 = vld [vmem:[%s791 + $0x10] sm:$0xff]
    %v795 = vld [vmem:[%s791 + $0x18] sm:$0xff]
    %v796 = vld [vmem:[%s791 + $0x20] sm:$0xff]
    %v797 = vld [vmem:[%s791 + $0x28] sm:$0xff]
    %v798 = vld [vmem:[%s791 + $0x30] sm:$0xff]
    %v799 = vld [vmem:[%s791 + $0x38] sm:$0xff]
    %v800 = vld [vmem:[%s791 + $0x40] sm:$0x1]
    %v801 = vpack.c.bf16 %v793, %v792
    %v802 = vpack.c.bf16 %v795, %v794
    %v803 = vpack.c.bf16 %v797, %v796
    %v804 = vpack.c.bf16 %v799, %v798
    %v805 = vld [vmem:[#allocation2] sm:$0xff]
    %v806 = vld [vmem:[#allocation2 + $0x8] sm:$0xff]
    %v807 = vld [vmem:[#allocation2 + $0x10] sm:$0xff]
    %v808 = vld [vmem:[#allocation2 + $0x18] sm:$0xff]
    %v809 = vld [vmem:[#allocation2 + $0x20] sm:$0xff]
    %v810 = vld [vmem:[#allocation2 + $0x28] sm:$0xff]
    %v811 = vld [vmem:[#allocation2 + $0x30] sm:$0xff]
    %v812 = vld [vmem:[#allocation2 + $0x38] sm:$0xff]
    %v813 = vpack.c.bf16 %v806, %v805
    %v814 = vpack.c.bf16 %v808, %v807
    %v815 = vpack.c.bf16 %v810, %v809
    %v816 = vpack.c.bf16 %v812, %v811
    %v817 = vlaneseq
    %v818 = vshrl.u32 %v817, 7
    %v819 = vsub.s32 0, %v818
    %v820 = vrot.slane %v800, %v819
    %v822 = vsel %vm16, %v813, 0
    %v825 = vsel %vm16, %v814, 0
    %v828 = vsel %vm16, %v815, 0
    %v831 = vsel %vm16, %v816, 0
    %833 = vmatprep.subr.bf16.mxu0 0
    %834 = vmatpush1.bf16.msra.mxu0 %v801
    %835 = vmatprep.subr.bf16.mxu0 0
    %836 = vmatpush1.bf16.msra.mxu0 %v802
    %837 = vmatprep.subr.bf16.mxu0 0
    %838 = vmatpush1.bf16.msra.mxu0 0
    %839 = vmatprep.subr.bf16.mxu0 0
    %840 = vmatpush1.bf16.msra.mxu0 0
    %841 = vmatprep.subr.bf16.mxu0 0
    %842 = vmatpush1.bf16.msra.mxu0 0
    %843 = vmatprep.subr.bf16.mxu0 0
    %844 = vmatpush1.bf16.msra.mxu0 0
    %845 = vmatprep.subr.bf16.mxu0 0
    %846 = vmatpush1.bf16.msra.mxu0 0
    %847 = vmatprep.subr.bf16.mxu0 0
    %848 = vmatpush1.bf16.msra.mxu0 0
    %849 = vmatprep.subr.bf16.mxu0 0
    %850 = vmatpush1.bf16.msra.mxu0 0
    %851 = vmatprep.subr.bf16.mxu0 0
    %852 = vmatpush1.bf16.msra.mxu0 0
    %853 = vmatprep.subr.bf16.mxu0 0
    %854 = vmatpush1.bf16.msra.mxu0 0
    %855 = vmatprep.subr.bf16.mxu0 0
    %856 = vmatpush1.bf16.msra.mxu0 0
    %857 = vmatprep.subr.bf16.mxu0 0
    %858 = vmatpush1.bf16.msra.mxu0 0
    %859 = vmatprep.subr.bf16.mxu0 0
    %860 = vmatpush1.bf16.msra.mxu0 0
    %861 = vmatprep.subr.bf16.mxu0 0
    %862 = vmatpush1.bf16.msra.mxu0 0
    %863 = vmatprep.subr.bf16.mxu0 0
    %864 = vmatpush1.bf16.msra.mxu0 0
    %865 = vmatprep.mubr.bf16.mxu0 0
    %866 = vmatmul.mubr.bf16.gmra.mrb[0].mxu0 %v822
    %v867 = vpop.f32.mrb[0].mxu0
    %v868 = vadd.f32 %v820, %v867
    %v869 = vpop.f32.mrb[0].mxu0
    %v870 = vpop.f32.mrb[0].mxu0
    %v871 = vadd.f32 %v820, %v870
    %v872 = vpop.f32.mrb[0].mxu0
    %873 = vmatprep.mubr.bf16.mxu0 0
    %874 = vmatmul.mubr.bf16.gmra.mrb[0].mxu0 %v825
    %v875 = vpop.f32.mrb[0].mxu0
    %v876 = vadd.f32 %v820, %v875
    %v877 = vpop.f32.mrb[0].mxu0
    %v878 = vpop.f32.mrb[0].mxu0
    %v879 = vadd.f32 %v820, %v878
    %v880 = vpop.f32.mrb[0].mxu0
    %881 = vmatprep.mubr.bf16.mxu0 0
    %882 = vmatmul.mubr.bf16.gmra.mrb[0].mxu0 %v828
    %v883 = vpop.f32.mrb[0].mxu0
    %v884 = vadd.f32 %v820, %v883
    %v885 = vpop.f32.mrb[0].mxu0
    %v886 = vpop.f32.mrb[0].mxu0
    %v887 = vadd.f32 %v820, %v886
    %v888 = vpop.f32.mrb[0].mxu0
    %889 = vmatprep.mubr.bf16.mxu0 0
    %890 = vmatmul.mubr.bf16.gmra.mrb[0].mxu0 %v831
    %v891 = vpop.f32.mrb[0].mxu0
    %v892 = vadd.f32 %v820, %v891
    %v893 = vpop.f32.mrb[0].mxu0
    %v894 = vpop.f32.mrb[0].mxu0
    %v895 = vadd.f32 %v820, %v894
    %v896 = vpop.f32.mrb[0].mxu0
    %897 = vdwg.mxu0
    %898 = vst [vmem:[#allocation3] sm:$0xff] %v868
    %899 = vst [vmem:[#allocation3 + $0x8] sm:$0xff] %v871
    %900 = vst [vmem:[#allocation3 + $0x10] sm:$0xff] %v876
    %901 = vst [vmem:[#allocation3 + $0x18] sm:$0xff] %v879
    %902 = vst [vmem:[#allocation3 + $0x20] sm:$0xff] %v884
    %903 = vst [vmem:[#allocation3 + $0x28] sm:$0xff] %v887
    %904 = vst [vmem:[#allocation3 + $0x30] sm:$0xff] %v892
    %905 = vst [vmem:[#allocation3 + $0x38] sm:$0xff] %v895
    %v906 = vld [vmem:[#allocation3] sm:$0xff]
    %907 = vmatprep.subr.bf16.mxu0 0
    %908 = vmatpush1.bf16.msra.mxu0 %v803
    %909 = vmatprep.subr.bf16.mxu0 0
    %910 = vmatpush1.bf16.msra.mxu0 %v804
    %911 = vmatprep.subr.bf16.mxu0 0
    %912 = vmatpush1.bf16.msra.mxu0 0
    %913 = vmatprep.subr.bf16.mxu0 0
    %914 = vmatpush1.bf16.msra.mxu0 0
    %915 = vmatprep.subr.bf16.mxu0 0
    %916 = vmatpush1.bf16.msra.mxu0 0
    %917 = vmatprep.subr.bf16.mxu0 0
    %918 = vmatpush1.bf16.msra.mxu0 0
    %919 = vmatprep.subr.bf16.mxu0 0
    %920 = vmatpush1.bf16.msra.mxu0 0
    %921 = vmatprep.subr.bf16.mxu0 0
    %922 = vmatpush1.bf16.msra.mxu0 0
    %923 = vmatprep.subr.bf16.mxu0 0
    %924 = vmatpush1.bf16.msra.mxu0 0
    %925 = vmatprep.subr.bf16.mxu0 0
    %926 = vmatpush1.bf16.msra.mxu0 0
    %927 = vmatprep.subr.bf16.mxu0 0
    %928 = vmatpush1.bf16.msra.mxu0 0
    %929 = vmatprep.subr.bf16.mxu0 0
    %930 = vmatpush1.bf16.msra.mxu0 0
    %931 = vmatprep.subr.bf16.mxu0 0
    %932 = vmatpush1.bf16.msra.mxu0 0
    %933 = vmatprep.subr.bf16.mxu0 0
    %934 = vmatpush1.bf16.msra.mxu0 0
    %935 = vmatprep.subr.bf16.mxu0 0
    %936 = vmatpush1.bf16.msra.mxu0 0
    %937 = vmatprep.subr.bf16.mxu0 0
    %938 = vmatpush1.bf16.msra.mxu0 0
    %939 = vmatprep.mubr.bf16.mxu0 0
    %940 = vmatmul.mubr.bf16.gmra.mrb[0].mxu0 %v173
    %v941 = vpop.f32.mrb[0].mxu0
    %v942 = vadd.f32 0.0, %v941
    %v943 = vpop.f32.mrb[0].mxu0
    %v944 = vpop.f32.mrb[0].mxu0
    %v945 = vpop.f32.mrb[0].mxu0
    %946 = vdwg.mxu0
    %v947 = vadd.f32 %v906, %v942
    %v948 = vxor.u32 %v947, 2147483648
    %v949 = vmul.f32 %v948, 1.442695
    %v950 = vpow.pop %v949
    %v951 = vadd.f32 %v950, 1.0
    %v952 = vrcp.pop %v951
    %v953 = vmul.f32 1.0, %v952
    %v954 = vtanh.pop %v947
    %v955 = vmul.f32 %v953, 0.0
    %957 = vrot.lane.b32.xlu0 %v954, 32
    %v958 = vpop.permute.xlu0 %957
    %v960 = vmul.f32 %v953, %v958
    %962 = vrot.lane.b32.xlu0 %v960, 32
    %v963 = vpop.permute.xlu0 %962
    %v965 = vadd.f32 %v955, %v963
    %v966 = vtanh.pop %v965
    %968 = vrot.lane.b32.xlu0 %v966, 32
    %v969 = vpop.permute.xlu0 %968
    %v971 = vmul.f32 %v953, %v969
    %v972 = vld [vmem:[#allocation3 + $0x8] sm:$0xff]
    %v973 = vpack.c.bf16 %v971, %v971
    %975 = vrot.lane.b32.xlu0 %v973, 64
    %v976 = vpop.permute.xlu0 %975
    %v978 = vsel %vm16, %v976, 0
    %980 = vmatprep.subr.bf16.mxu0 0
    %981 = vmatpush1.bf16.msra.mxu0 %v803
    %982 = vmatprep.subr.bf16.mxu0 0
    %983 = vmatpush1.bf16.msra.mxu0 %v804
    %984 = vmatprep.subr.bf16.mxu0 0
    %985 = vmatpush1.bf16.msra.mxu0 0
    %986 = vmatprep.subr.bf16.mxu0 0
    %987 = vmatpush1.bf16.msra.mxu0 0
    %988 = vmatprep.subr.bf16.mxu0 0
    %989 = vmatpush1.bf16.msra.mxu0 0
    %990 = vmatprep.subr.bf16.mxu0 0
    %991 = vmatpush1.bf16.msra.mxu0 0
    %992 = vmatprep.subr.bf16.mxu0 0
    %993 = vmatpush1.bf16.msra.mxu0 0
    %994 = vmatprep.subr.bf16.mxu0 0
    %995 = vmatpush1.bf16.msra.mxu0 0
    %996 = vmatprep.subr.bf16.mxu0 0
    %997 = vmatpush1.bf16.msra.mxu0 0
    %998 = vmatprep.subr.bf16.mxu0 0
    %999 = vmatpush1.bf16.msra.mxu0 0
    %1000 = vmatprep.subr.bf16.mxu0 0
    %1001 = vmatpush1.bf16.msra.mxu0 0
    %1002 = vmatprep.subr.bf16.mxu0 0
    %1003 = vmatpush1.bf16.msra.mxu0 0
    %1004 = vmatprep.subr.bf16.mxu0 0
    %1005 = vmatpush1.bf16.msra.mxu0 0
    %1006 = vmatprep.subr.bf16.mxu0 0
    %1007 = vmatpush1.bf16.msra.mxu0 0
    %1008 = vmatprep.subr.bf16.mxu0 0
    %1009 = vmatpush1.bf16.msra.mxu0 0
    %1010 = vmatprep.subr.bf16.mxu0 0
    %1011 = vmatpush1.bf16.msra.mxu0 0
    %1012 = vmatprep.mubr.bf16.mxu0 0
    %1013 = vmatmul.mubr.bf16.gmra.mrb[0].mxu0 %v978
    %v1014 = vpop.f32.mrb[0].mxu0
    %v1015 = vadd.f32 0.0, %v1014
    %v1016 = vpop.f32.mrb[0].mxu0
    %v1017 = vpop.f32.mrb[0].mxu0
    %v1018 = vpop.f32.mrb[0].mxu0
    %1019 = vdwg.mxu0
    %v1020 = vadd.f32 %v972, %v1015
    %v1021 = vxor.u32 %v1020, 2147483648
    %v1022 = vmul.f32 %v1021, 1.442695
    %v1023 = vpow.pop %v1022
    %v1024 = vadd.f32 %v1023, 1.0
    %v1025 = vrcp.pop %v1024
    %v1026 = vmul.f32 1.0, %v1025
    %v1027 = vtanh.pop %v1020
    %v1028 = vmul.f32 %v1026, %v965
    %1030 = vrot.lane.b32.xlu0 %v1027, 32
    %v1031 = vpop.permute.xlu0 %1030
    %v1033 = vmul.f32 %v1026, %v1031
    %1035 = vrot.lane.b32.xlu0 %v1033, 32
    %v1036 = vpop.permute.xlu0 %1035
    %v1038 = vadd.f32 %v1028, %v1036
    %v1039 = vtanh.pop %v1038
    %1041 = vrot.lane.b32.xlu0 %v1039, 32
    %v1042 = vpop.permute.xlu0 %1041
    %v1044 = vmul.f32 %v1026, %v1042
    %v1045 = vld [vmem:[#allocation3 + $0x10] sm:$0xff]
    %v1046 = vpack.c.bf16 %v1044, %v1044
    %1048 = vrot.lane.b32.xlu0 %v1046, 64
    %v1049 = vpop.permute.xlu0 %1048
    %v1051 = vsel %vm16, %v1049, 0
    %1053 = vmatprep.subr.bf16.mxu0 0
    %1054 = vmatpush1.bf16.msra.mxu0 %v803
    %1055 = vmatprep.subr.bf16.mxu0 0
    %1056 = vmatpush1.bf16.msra.mxu0 %v804
    %1057 = vmatprep.subr.bf16.mxu0 0
    %1058 = vmatpush1.bf16.msra.mxu0 0
    %1059 = vmatprep.subr.bf16.mxu0 0
    %1060 = vmatpush1.bf16.msra.mxu0 0
    %1061 = vmatprep.subr.bf16.mxu0 0
    %1062 = vmatpush1.bf16.msra.mxu0 0
    %1063 = vmatprep.subr.bf16.mxu0 0
    %1064 = vmatpush1.bf16.msra.mxu0 0
    %1065 = vmatprep.subr.bf16.mxu0 0
    %1066 = vmatpush1.bf16.msra.mxu0 0
    %1067 = vmatprep.subr.bf16.mxu0 0
    %1068 = vmatpush1.bf16.msra.mxu0 0
    %1069 = vmatprep.subr.bf16.mxu0 0
    %1070 = vmatpush1.bf16.msra.mxu0 0
    %1071 = vmatprep.subr.bf16.mxu0 0
    %1072 = vmatpush1.bf16.msra.mxu0 0
    %1073 = vmatprep.subr.bf16.mxu0 0
    %1074 = vmatpush1.bf16.msra.mxu0 0
    %1075 = vmatprep.subr.bf16.mxu0 0
    %1076 = vmatpush1.bf16.msra.mxu0 0
    %1077 = vmatprep.subr.bf16.mxu0 0
    %1078 = vmatpush1.bf16.msra.mxu0 0
    %1079 = vmatprep.subr.bf16.mxu0 0
    %1080 = vmatpush1.bf16.msra.mxu0 0
    %1081 = vmatprep.subr.bf16.mxu0 0
    %1082 = vmatpush1.bf16.msra.mxu0 0
    %1083 = vmatprep.subr.bf16.mxu0 0
    %1084 = vmatpush1.bf16.msra.mxu0 0
    %1085 = vmatprep.mubr.bf16.mxu0 0
    %1086 = vmatmul.mubr.bf16.gmra.mrb[0].mxu0 %v1051
    %v1087 = vpop.f32.mrb[0].mxu0
    %v1088 = vadd.f32 0.0, %v1087
    %v1089 = vpop.f32.mrb[0].mxu0
    %v1090 = vpop.f32.mrb[0].mxu0
    %v1091 = vpop.f32.mrb[0].mxu0
    %1092 = vdwg.mxu0
    %v1093 = vadd.f32 %v1045, %v1088
    %v1094 = vxor.u32 %v1093, 2147483648
    %v1095 = vmul.f32 %v1094, 1.442695
    %v1096 = vpow.pop %v1095
    %v1097 = vadd.f32 %v1096, 1.0
    %v1098 = vrcp.pop %v1097
    %v1099 = vmul.f32 1.0, %v1098
    %v1100 = vtanh.pop %v1093
    %v1101 = vmul.f32 %v1099, %v1038
    %1103 = vrot.lane.b32.xlu0 %v1100, 32
    %v1104 = vpop.permute.xlu0 %1103
    %v1106 = vmul.f32 %v1099, %v1104
    %1108 = vrot.lane.b32.xlu0 %v1106, 32
    %v1109 = vpop.permute.xlu0 %1108
    %v1111 = vadd.f32 %v1101, %v1109
    %v1112 = vtanh.pop %v1111
    %1114 = vrot.lane.b32.xlu0 %v1112, 32
    %v1115 = vpop.permute.xlu0 %1114
    %v1117 = vmul.f32 %v1099, %v1115
    %v1118 = vld [vmem:[#allocation3 + $0x18] sm:$0xff]
    %v1119 = vpack.c.bf16 %v1117, %v1117
    %1121 = vrot.lane.b32.xlu0 %v1119, 64
    %v1122 = vpop.permute.xlu0 %1121
    %v1124 = vsel %vm16, %v1122, 0
    %1126 = vmatprep.subr.bf16.mxu0 0
    %1127 = vmatpush1.bf16.msra.mxu0 %v803
    %1128 = vmatprep.subr.bf16.mxu0 0
    %1129 = vmatpush1.bf16.msra.mxu0 %v804
    %1130 = vmatprep.subr.bf16.mxu0 0
    %1131 = vmatpush1.bf16.msra.mxu0 0
    %1132 = vmatprep.subr.bf16.mxu0 0
    %1133 = vmatpush1.bf16.msra.mxu0 0
    %1134 = vmatprep.subr.bf16.mxu0 0
    %1135 = vmatpush1.bf16.msra.mxu0 0
    %1136 = vmatprep.subr.bf16.mxu0 0
    %1137 = vmatpush1.bf16.msra.mxu0 0
    %1138 = vmatprep.subr.bf16.mxu0 0
    %1139 = vmatpush1.bf16.msra.mxu0 0
    %1140 = vmatprep.subr.bf16.mxu0 0
    %1141 = vmatpush1.bf16.msra.mxu0 0
    %1142 = vmatprep.subr.bf16.mxu0 0
    %1143 = vmatpush1.bf16.msra.mxu0 0
    %1144 = vmatprep.subr.bf16.mxu0 0
    %1145 = vmatpush1.bf16.msra.mxu0 0
    %1146 = vmatprep.subr.bf16.mxu0 0
    %1147 = vmatpush1.bf16.msra.mxu0 0
    %1148 = vmatprep.subr.bf16.mxu0 0
    %1149 = vmatpush1.bf16.msra.mxu0 0
    %1150 = vmatprep.subr.bf16.mxu0 0
    %1151 = vmatpush1.bf16.msra.mxu0 0
    %1152 = vmatprep.subr.bf16.mxu0 0
    %1153 = vmatpush1.bf16.msra.mxu0 0
    %1154 = vmatprep.subr.bf16.mxu0 0
    %1155 = vmatpush1.bf16.msra.mxu0 0
    %1156 = vmatprep.subr.bf16.mxu0 0
    %1157 = vmatpush1.bf16.msra.mxu0 0
    %1158 = vmatprep.mubr.bf16.mxu0 0
    %1159 = vmatmul.mubr.bf16.gmra.mrb[0].mxu0 %v1124
    %v1160 = vpop.f32.mrb[0].mxu0
    %v1161 = vadd.f32 0.0, %v1160
    %v1162 = vpop.f32.mrb[0].mxu0
    %v1163 = vpop.f32.mrb[0].mxu0
    %v1164 = vpop.f32.mrb[0].mxu0
    %1165 = vdwg.mxu0
    %v1166 = vadd.f32 %v1118, %v1161
    %v1167 = vxor.u32 %v1166, 2147483648
    %v1168 = vmul.f32 %v1167, 1.442695
    %v1169 = vpow.pop %v1168
    %v1170 = vadd.f32 %v1169, 1.0
    %v1171 = vrcp.pop %v1170
    %v1172 = vmul.f32 1.0, %v1171
    %v1173 = vtanh.pop %v1166
    %v1174 = vmul.f32 %v1172, %v1111
    %1176 = vrot.lane.b32.xlu0 %v1173, 32
    %v1177 = vpop.permute.xlu0 %1176
    %v1179 = vmul.f32 %v1172, %v1177
    %1181 = vrot.lane.b32.xlu0 %v1179, 32
    %v1182 = vpop.permute.xlu0 %1181
    %v1184 = vadd.f32 %v1174, %v1182
    %v1185 = vtanh.pop %v1184
    %1187 = vrot.lane.b32.xlu0 %v1185, 32
    %v1188 = vpop.permute.xlu0 %1187
    %v1190 = vmul.f32 %v1172, %v1188
    %v1191 = vld [vmem:[#allocation3 + $0x20] sm:$0xff]
    %v1192 = vpack.c.bf16 %v1190, %v1190
    %1194 = vrot.lane.b32.xlu0 %v1192, 64
    %v1195 = vpop.permute.xlu0 %1194
    %v1197 = vsel %vm16, %v1195, 0
    %1199 = vmatprep.subr.bf16.mxu0 0
    %1200 = vmatpush1.bf16.msra.mxu0 %v803
    %1201 = vmatprep.subr.bf16.mxu0 0
    %1202 = vmatpush1.bf16.msra.mxu0 %v804
    %1203 = vmatprep.subr.bf16.mxu0 0
    %1204 = vmatpush1.bf16.msra.mxu0 0
    %1205 = vmatprep.subr.bf16.mxu0 0
    %1206 = vmatpush1.bf16.msra.mxu0 0
    %1207 = vmatprep.subr.bf16.mxu0 0
    %1208 = vmatpush1.bf16.msra.mxu0 0
    %1209 = vmatprep.subr.bf16.mxu0 0
    %1210 = vmatpush1.bf16.msra.mxu0 0
    %1211 = vmatprep.subr.bf16.mxu0 0
    %1212 = vmatpush1.bf16.msra.mxu0 0
    %1213 = vmatprep.subr.bf16.mxu0 0
    %1214 = vmatpush1.bf16.msra.mxu0 0
    %1215 = vmatprep.subr.bf16.mxu0 0
    %1216 = vmatpush1.bf16.msra.mxu0 0
    %1217 = vmatprep.subr.bf16.mxu0 0
    %1218 = vmatpush1.bf16.msra.mxu0 0
    %1219 = vmatprep.subr.bf16.mxu0 0
    %1220 = vmatpush1.bf16.msra.mxu0 0
    %1221 = vmatprep.subr.bf16.mxu0 0
    %1222 = vmatpush1.bf16.msra.mxu0 0
    %1223 = vmatprep.subr.bf16.mxu0 0
    %1224 = vmatpush1.bf16.msra.mxu0 0
    %1225 = vmatprep.subr.bf16.mxu0 0
    %1226 = vmatpush1.bf16.msra.mxu0 0
    %1227 = vmatprep.subr.bf16.mxu0 0
    %1228 = vmatpush1.bf16.msra.mxu0 0
    %1229 = vmatprep.subr.bf16.mxu0 0
    %1230 = vmatpush1.bf16.msra.mxu0 0
    %1231 = vmatprep.mubr.bf16.mxu0 0
    %1232 = vmatmul.mubr.bf16.gmra.mrb[0].mxu0 %v1197
    %v1233 = vpop.f32.mrb[0].mxu0
    %v1234 = vadd.f32 0.0, %v1233
    %v1235 = vpop.f32.mrb[0].mxu0
    %v1236 = vpop.f32.mrb[0].mxu0
    %v1237 = vpop.f32.mrb[0].mxu0
    %1238 = vdwg.mxu0
    %v1239 = vadd.f32 %v1191, %v1234
    %v1240 = vxor.u32 %v1239, 2147483648
    %v1241 = vmul.f32 %v1240, 1.442695
    %v1242 = vpow.pop %v1241
    %v1243 = vadd.f32 %v1242, 1.0
    %v1244 = vrcp.pop %v1243
    %v1245 = vmul.f32 1.0, %v1244
    %v1246 = vtanh.pop %v1239
    %v1247 = vmul.f32 %v1245, %v1184
    %1249 = vrot.lane.b32.xlu0 %v1246, 32
    %v1250 = vpop.permute.xlu0 %1249
    %v1252 = vmul.f32 %v1245, %v1250
    %1254 = vrot.lane.b32.xlu0 %v1252, 32
    %v1255 = vpop.permute.xlu0 %1254
    %v1257 = vadd.f32 %v1247, %v1255
    %v1258 = vtanh.pop %v1257
    %1260 = vrot.lane.b32.xlu0 %v1258, 32
    %v1261 = vpop.permute.xlu0 %1260
    %v1263 = vmul.f32 %v1245, %v1261
    %v1264 = vld [vmem:[#allocation3 + $0x28] sm:$0xff]
    %v1265 = vpack.c.bf16 %v1263, %v1263
    %1267 = vrot.lane.b32.xlu0 %v1265, 64
    %v1268 = vpop.permute.xlu0 %1267
    %v1270 = vsel %vm16, %v1268, 0
    %1272 = vmatprep.subr.bf16.mxu0 0
    %1273 = vmatpush1.bf16.msra.mxu0 %v803
    %1274 = vmatprep.subr.bf16.mxu0 0
    %1275 = vmatpush1.bf16.msra.mxu0 %v804
    %1276 = vmatprep.subr.bf16.mxu0 0
    %1277 = vmatpush1.bf16.msra.mxu0 0
    %1278 = vmatprep.subr.bf16.mxu0 0
    %1279 = vmatpush1.bf16.msra.mxu0 0
    %1280 = vmatprep.subr.bf16.mxu0 0
    %1281 = vmatpush1.bf16.msra.mxu0 0
    %1282 = vmatprep.subr.bf16.mxu0 0
    %1283 = vmatpush1.bf16.msra.mxu0 0
    %1284 = vmatprep.subr.bf16.mxu0 0
    %1285 = vmatpush1.bf16.msra.mxu0 0
    %1286 = vmatprep.subr.bf16.mxu0 0
    %1287 = vmatpush1.bf16.msra.mxu0 0
    %1288 = vmatprep.subr.bf16.mxu0 0
    %1289 = vmatpush1.bf16.msra.mxu0 0
    %1290 = vmatprep.subr.bf16.mxu0 0
    %1291 = vmatpush1.bf16.msra.mxu0 0
    %1292 = vmatprep.subr.bf16.mxu0 0
    %1293 = vmatpush1.bf16.msra.mxu0 0
    %1294 = vmatprep.subr.bf16.mxu0 0
    %1295 = vmatpush1.bf16.msra.mxu0 0
    %1296 = vmatprep.subr.bf16.mxu0 0
    %1297 = vmatpush1.bf16.msra.mxu0 0
    %1298 = vmatprep.subr.bf16.mxu0 0
    %1299 = vmatpush1.bf16.msra.mxu0 0
    %1300 = vmatprep.subr.bf16.mxu0 0
    %1301 = vmatpush1.bf16.msra.mxu0 0
    %1302 = vmatprep.subr.bf16.mxu0 0
    %1303 = vmatpush1.bf16.msra.mxu0 0
    %1304 = vmatprep.mubr.bf16.mxu0 0
    %1305 = vmatmul.mubr.bf16.gmra.mrb[0].mxu0 %v1270
    %v1306 = vpop.f32.mrb[0].mxu0
    %v1307 = vadd.f32 0.0, %v1306
    %v1308 = vpop.f32.mrb[0].mxu0
    %v1309 = vpop.f32.mrb[0].mxu0
    %v1310 = vpop.f32.mrb[0].mxu0
    %1311 = vdwg.mxu0
    %v1312 = vadd.f32 %v1264, %v1307
    %v1313 = vxor.u32 %v1312, 2147483648
    %v1314 = vmul.f32 %v1313, 1.442695
    %v1315 = vpow.pop %v1314
    %v1316 = vadd.f32 %v1315, 1.0
    %v1317 = vrcp.pop %v1316
    %v1318 = vmul.f32 1.0, %v1317
    %v1319 = vtanh.pop %v1312
    %v1320 = vmul.f32 %v1318, %v1257
    %1322 = vrot.lane.b32.xlu0 %v1319, 32
    %v1323 = vpop.permute.xlu0 %1322
    %v1325 = vmul.f32 %v1318, %v1323
    %1327 = vrot.lane.b32.xlu0 %v1325, 32
    %v1328 = vpop.permute.xlu0 %1327
    %v1330 = vadd.f32 %v1320, %v1328
    %v1331 = vtanh.pop %v1330
    %1333 = vrot.lane.b32.xlu0 %v1331, 32
    %v1334 = vpop.permute.xlu0 %1333
    %v1336 = vmul.f32 %v1318, %v1334
    %v1337 = vld [vmem:[#allocation3 + $0x30] sm:$0xff]
    %v1338 = vpack.c.bf16 %v1336, %v1336
    %1340 = vrot.lane.b32.xlu0 %v1338, 64
    %v1341 = vpop.permute.xlu0 %1340
    %v1343 = vsel %vm16, %v1341, 0
    %1345 = vmatprep.subr.bf16.mxu0 0
    %1346 = vmatpush1.bf16.msra.mxu0 %v803
    %1347 = vmatprep.subr.bf16.mxu0 0
    %1348 = vmatpush1.bf16.msra.mxu0 %v804
    %1349 = vmatprep.subr.bf16.mxu0 0
    %1350 = vmatpush1.bf16.msra.mxu0 0
    %1351 = vmatprep.subr.bf16.mxu0 0
    %1352 = vmatpush1.bf16.msra.mxu0 0
    %1353 = vmatprep.subr.bf16.mxu0 0
    %1354 = vmatpush1.bf16.msra.mxu0 0
    %1355 = vmatprep.subr.bf16.mxu0 0
    %1356 = vmatpush1.bf16.msra.mxu0 0
    %1357 = vmatprep.subr.bf16.mxu0 0
    %1358 = vmatpush1.bf16.msra.mxu0 0
    %1359 = vmatprep.subr.bf16.mxu0 0
    %1360 = vmatpush1.bf16.msra.mxu0 0
    %1361 = vmatprep.subr.bf16.mxu0 0
    %1362 = vmatpush1.bf16.msra.mxu0 0
    %1363 = vmatprep.subr.bf16.mxu0 0
    %1364 = vmatpush1.bf16.msra.mxu0 0
    %1365 = vmatprep.subr.bf16.mxu0 0
    %1366 = vmatpush1.bf16.msra.mxu0 0
    %1367 = vmatprep.subr.bf16.mxu0 0
    %1368 = vmatpush1.bf16.msra.mxu0 0
    %1369 = vmatprep.subr.bf16.mxu0 0
    %1370 = vmatpush1.bf16.msra.mxu0 0
    %1371 = vmatprep.subr.bf16.mxu0 0
    %1372 = vmatpush1.bf16.msra.mxu0 0
    %1373 = vmatprep.subr.bf16.mxu0 0
    %1374 = vmatpush1.bf16.msra.mxu0 0
    %1375 = vmatprep.subr.bf16.mxu0 0
    %1376 = vmatpush1.bf16.msra.mxu0 0
    %1377 = vmatprep.mubr.bf16.mxu0 0
    %1378 = vmatmul.mubr.bf16.gmra.mrb[0].mxu0 %v1343
    %v1379 = vpop.f32.mrb[0].mxu0
    %v1380 = vadd.f32 0.0, %v1379
    %v1381 = vpop.f32.mrb[0].mxu0
    %v1382 = vpop.f32.mrb[0].mxu0
    %v1383 = vpop.f32.mrb[0].mxu0
    %1384 = vdwg.mxu0
    %v1385 = vadd.f32 %v1337, %v1380
    %v1386 = vxor.u32 %v1385, 2147483648
    %v1387 = vmul.f32 %v1386, 1.442695
    %v1388 = vpow.pop %v1387
    %v1389 = vadd.f32 %v1388, 1.0
    %v1390 = vrcp.pop %v1389
    %v1391 = vmul.f32 1.0, %v1390
    %v1392 = vtanh.pop %v1385
    %v1393 = vmul.f32 %v1391, %v1330
    %1395 = vrot.lane.b32.xlu0 %v1392, 32
    %v1396 = vpop.permute.xlu0 %1395
    %v1398 = vmul.f32 %v1391, %v1396
    %1400 = vrot.lane.b32.xlu0 %v1398, 32
    %v1401 = vpop.permute.xlu0 %1400
    %v1403 = vadd.f32 %v1393, %v1401
    %v1404 = vtanh.pop %v1403
    %1406 = vrot.lane.b32.xlu0 %v1404, 32
    %v1407 = vpop.permute.xlu0 %1406
    %v1409 = vmul.f32 %v1391, %v1407
    %v1410 = vld [vmem:[#allocation3 + $0x38] sm:$0xff]
    %v1411 = vpack.c.bf16 %v1409, %v1409
    %1413 = vrot.lane.b32.xlu0 %v1411, 64
    %v1414 = vpop.permute.xlu0 %1413
    %v1416 = vsel %vm16, %v1414, 0
    %1418 = vmatprep.subr.bf16.mxu0 0
    %1419 = vmatpush1.bf16.msra.mxu0 %v803
    %1420 = vmatprep.subr.bf16.mxu0 0
    %1421 = vmatpush1.bf16.msra.mxu0 %v804
    %1422 = vmatprep.subr.bf16.mxu0 0
    %1423 = vmatpush1.bf16.msra.mxu0 0
    %1424 = vmatprep.subr.bf16.mxu0 0
    %1425 = vmatpush1.bf16.msra.mxu0 0
    %1426 = vmatprep.subr.bf16.mxu0 0
    %1427 = vmatpush1.bf16.msra.mxu0 0
    %1428 = vmatprep.subr.bf16.mxu0 0
    %1429 = vmatpush1.bf16.msra.mxu0 0
    %1430 = vmatprep.subr.bf16.mxu0 0
    %1431 = vmatpush1.bf16.msra.mxu0 0
    %1432 = vmatprep.subr.bf16.mxu0 0
    %1433 = vmatpush1.bf16.msra.mxu0 0
    %1434 = vmatprep.subr.bf16.mxu0 0
    %1435 = vmatpush1.bf16.msra.mxu0 0
    %1436 = vmatprep.subr.bf16.mxu0 0
    %1437 = vmatpush1.bf16.msra.mxu0 0
    %1438 = vmatprep.subr.bf16.mxu0 0
    %1439 = vmatpush1.bf16.msra.mxu0 0
    %1440 = vmatprep.subr.bf16.mxu0 0
    %1441 = vmatpush1.bf16.msra.mxu0 0
    %1442 = vmatprep.subr.bf16.mxu0 0
    %1443 = vmatpush1.bf16.msra.mxu0 0
    %1444 = vmatprep.subr.bf16.mxu0 0
    %1445 = vmatpush1.bf16.msra.mxu0 0
    %1446 = vmatprep.subr.bf16.mxu0 0
    %1447 = vmatpush1.bf16.msra.mxu0 0
    %1448 = vmatprep.subr.bf16.mxu0 0
    %1449 = vmatpush1.bf16.msra.mxu0 0
    %1450 = vmatprep.mubr.bf16.mxu0 0
    %1451 = vmatmul.mubr.bf16.gmra.mrb[0].mxu0 %v1416
    %v1452 = vpop.f32.mrb[0].mxu0
    %v1453 = vadd.f32 0.0, %v1452
    %v1454 = vpop.f32.mrb[0].mxu0
    %v1455 = vpop.f32.mrb[0].mxu0
    %v1456 = vpop.f32.mrb[0].mxu0
    %1457 = vdwg.mxu0
    %v1458 = vadd.f32 %v1410, %v1453
    %v1459 = vxor.u32 %v1458, 2147483648
    %v1460 = vmul.f32 %v1459, 1.442695
    %v1461 = vpow.pop %v1460
    %v1462 = vadd.f32 %v1461, 1.0
    %v1463 = vrcp.pop %v1462
    %v1464 = vmul.f32 1.0, %v1463
    %v1465 = vtanh.pop %v1458
    %v1466 = vmul.f32 %v1464, %v1403
    %1468 = vrot.lane.b32.xlu0 %v1465, 32
    %v1469 = vpop.permute.xlu0 %1468
    %v1471 = vmul.f32 %v1464, %v1469
    %1473 = vrot.lane.b32.xlu0 %v1471, 32
    %v1474 = vpop.permute.xlu0 %1473
    %v1476 = vadd.f32 %v1466, %v1474
    %v1477 = vtanh.pop %v1476
    %1479 = vrot.lane.b32.xlu0 %v1477, 32
    %v1480 = vpop.permute.xlu0 %1479
    %v1482 = vmul.f32 %v1464, %v1480
    %v1483 = vld [vmem:[%s2] sm:$0xff]
    %v1484 = vld [vmem:[%s2 + $0x8] sm:$0xff]
    %v1485 = vld [vmem:[%s2 + $0x10] sm:$0xff]
    %v1486 = vld [vmem:[%s2 + $0x18] sm:$0xff]
    %v1487 = vpack.c.bf16 %v1484, %v1483
    %v1488 = vpack.c.bf16 %v1486, %v1485
    %v1489 = vld [vmem:[%s2 + $0x20] sm:$0x1]
    %v1490 = vpack.c.bf16 %v1482, %v1482
    %v1491 = vlaneseq
    %v1492 = vshrl.u32 %v1491, 7
    %v1493 = vsub.s32 0, %v1492
    %v1494 = vrot.slane %v1489, %v1493
    %1496 = vrot.lane.b32.xlu0 %v1490, 64
    %v1497 = vpop.permute.xlu0 %1496
    %v1499 = vsel %vm16, %v1497, 0
    %1501 = vmatprep.subr.bf16.mxu0 0
    %1502 = vmatpush1.bf16.msra.mxu0 %v1487
    %1503 = vmatprep.subr.bf16.mxu0 0
    %1504 = vmatpush1.bf16.msra.mxu0 %v1488
    %1505 = vmatprep.subr.bf16.mxu0 0
    %1506 = vmatpush1.bf16.msra.mxu0 0
    %1507 = vmatprep.subr.bf16.mxu0 0
    %1508 = vmatpush1.bf16.msra.mxu0 0
    %1509 = vmatprep.subr.bf16.mxu0 0
    %1510 = vmatpush1.bf16.msra.mxu0 0
    %1511 = vmatprep.subr.bf16.mxu0 0
    %1512 = vmatpush1.bf16.msra.mxu0 0
    %1513 = vmatprep.subr.bf16.mxu0 0
    %1514 = vmatpush1.bf16.msra.mxu0 0
    %1515 = vmatprep.subr.bf16.mxu0 0
    %1516 = vmatpush1.bf16.msra.mxu0 0
    %1517 = vmatprep.subr.bf16.mxu0 0
    %1518 = vmatpush1.bf16.msra.mxu0 0
    %1519 = vmatprep.subr.bf16.mxu0 0
    %1520 = vmatpush1.bf16.msra.mxu0 0
    %1521 = vmatprep.subr.bf16.mxu0 0
    %1522 = vmatpush1.bf16.msra.mxu0 0
    %1523 = vmatprep.subr.bf16.mxu0 0
    %1524 = vmatpush1.bf16.msra.mxu0 0
    %1525 = vmatprep.subr.bf16.mxu0 0
    %1526 = vmatpush1.bf16.msra.mxu0 0
    %1527 = vmatprep.subr.bf16.mxu0 0
    %1528 = vmatpush1.bf16.msra.mxu0 0
    %1529 = vmatprep.subr.bf16.mxu0 0
    %1530 = vmatpush1.bf16.msra.mxu0 0
    %1531 = vmatprep.subr.bf16.mxu0 0
    %1532 = vmatpush1.bf16.msra.mxu0 0
    %1533 = vmatprep.mubr.bf16.mxu0 0
    %1534 = vmatmul.mubr.bf16.gmra.mrb[0].mxu0 %v1499
    %v1535 = vpop.f32.mrb[0].mxu0
    %v1536 = vadd.f32 %v1494, %v1535
    %v1537 = vpop.f32.mrb[0].mxu0
    %v1538 = vpop.f32.mrb[0].mxu0
    %v1539 = vpop.f32.mrb[0].mxu0
    %1540 = vdwg.mxu0
    %1541 = vst.msk [vmem:[#allocation4] sm:$0x3] %vm26, %v1536
    // Predicated region
    $region14: #{task_config_network_forward.1} parent=1 // pred_check
      _
    $region15: #{task_config_network_forward.1} parent=1 // pred_check_branch
      %1543 = sbr.rel (0) target = $region17
    $region16: #{task_config_network_forward.1} parent=1 // pred_region
      %s1545 = ssub.s32 32, 32
      %1546 = vsyncadd [#allocation5], %s1545
      %s1548 = sshll.u32 [#allocation4], 4
      %s1549 = int_to_ptr.vmem [resolvable:$true] %s1548
      %1551 = dma.vmem_to_hbm [thread:$0]  %s1549, 32, %s3, [#allocation5]
    $region17: #{task_config_network_forward.1} parent=1 // pred_fallthru
      _
    // Predicated region
    $region18: #{task_config_network_forward.1} parent=1 // pred_check
      _
    $region19: #{task_config_network_forward.1} parent=1 // pred_check_branch
      %1553 = sbr.rel (0) target = $region21
    $region20: #{task_config_network_forward.1} parent=1 // pred_region
      %1554 = dma.done [#allocation5], 32
    $region21: #{task_config_network_forward.1} parent=1 // pred_fallthru
      _
    %1555 = vsyncpa [#allocation5], 1

</llo_original>
